<compile_context>
chip_gen: v7x
topology: tpu7x:2x2x1
jax: 0.10.0
libtpu: 0.0.40
codegen_flags: <defaults>
</compile_context>

<pallas_src>
import math

import jax
import jax.numpy as jnp
from jax.experimental import pallas as pl
from jax.experimental.pallas import tpu as pltpu

C = 64          # fixed by the module (Conv2d(64, 64, ...))
EPS = 1e-5      # nn.BatchNorm2d default eps


def _pad_hw1(a):
    """Zero-pad H and W by 1 on each side, in-register (concat with zero slabs)."""
    N, H, W, Cc = a.shape
    zw = jnp.zeros((N, H, 1, Cc), a.dtype)
    a = jnp.concatenate([zw, a, zw], axis=2)            # (N, H, W+2, C)
    zh = jnp.zeros((N, 1, W + 2, Cc), a.dtype)
    return jnp.concatenate([zh, a, zh], axis=1)         # (N, H+2, W+2, C)


def _im2col_3x3(a_pad, H, W):
    """(N, H+2, W+2, C) -> (N*H*W, 9*C) patch matrix; tap order (ky, kx, cin)."""
    N, _, _, Cc = a_pad.shape
    taps = [a_pad[:, ky:ky + H, kx:kx + W, :]
            for ky in range(3) for kx in range(3)]
    patches = jnp.concatenate(taps, axis=-1)            # (N, H, W, 9C)
    return patches.reshape(N * H * W, 9 * Cc)


def _bn_scale_shift(x2d, gamma, beta):
    """Training-mode BN (batch mean / biased var) folded to one scale/shift."""
    mean = jnp.mean(x2d, axis=0, keepdims=True)                     # (1, C)
    var = jnp.mean(jnp.square(x2d - mean), axis=0, keepdims=True)   # (1, C)
    scale = gamma * jax.lax.rsqrt(var + EPS)
    shift = beta - mean * scale
    return scale, shift


def resnet_layer3_kernel(x_ref, w1_ref, g1_ref, be1_ref,
                         w2_ref, g2_ref, be2_ref, out_ref):
    N, H, W, Cc = x_ref.shape
    M = N * H * W

    x = x_ref[...]                                      # (N, H, W, C), un-padded
    x2d = x.reshape(M, Cc)                              # residual path

    # out1 = relu(x); conv1 as a single K=9C matmul (bias omitted: BN cancels it)
    a_pad = _pad_hw1(jnp.maximum(x, 0.0))
    p1 = _im2col_3x3(a_pad, H, W)                       # (M, 9C)
    c1 = jnp.dot(p1, w1_ref[...], preferred_element_type=jnp.float32)

    # BN1 + relu fused into one FMA
    s1, t1 = _bn_scale_shift(c1, g1_ref[...], be1_ref[...])
    h1 = jnp.maximum(c1 * s1 + t1, 0.0)                 # (M, C)

    # conv2 (same structure)
    h1_pad = _pad_hw1(h1.reshape(N, H, W, Cc))
    p2 = _im2col_3x3(h1_pad, H, W)
    c2 = jnp.dot(p2, w2_ref[...], preferred_element_type=jnp.float32)

    # BN2 + residual + final relu fused
    s2, t2 = _bn_scale_shift(c2, g2_ref[...], be2_ref[...])
    out2d = jnp.maximum(c2 * s2 + t2 + x2d, 0.0)

    out_ref[...] = out2d.reshape(N, H, W, Cc).astype(out_ref.dtype)


@jax.jit
def resnet18_layer3_forward(x_nchw, params):
    w1, b1, g1, be1, w2, b2, g2, be2 = params
    del b1, b2  # conv biases cancel exactly under batch-statistics BN
    N, Cc, H, W = x_nchw.shape

    # TODO(synk): optionally fold this NCHW<->NHWC transpose pair into the kernel
    # (per-batch 2D transposes) to drop the two remaining XLA layout ops.
    x = jnp.transpose(x_nchw, (0, 2, 3, 1)).astype(jnp.float32)      # NCHW -> NHWC

    # HWIO (3,3,C,C) -> (9C, C); row order (ky, kx, cin) matches _im2col_3x3.
    w1m = w1.reshape(9 * Cc, Cc).astype(jnp.float32)
    w2m = w2.reshape(9 * Cc, Cc).astype(jnp.float32)

    flops = 2 * 2 * (N * H * W) * (9 * Cc) * Cc
    bytes_accessed = 4 * (2 * x.size + w1m.size + w2m.size + 4 * Cc)

    out_nhwc = pl.pallas_call(
        resnet_layer3_kernel,
        out_shape=jax.ShapeDtypeStruct((N, H, W, Cc), jnp.float32),
        in_specs=[pl.BlockSpec(memory_space=pltpu.MemorySpace.VMEM)] * 7,
        out_specs=pl.BlockSpec(memory_space=pltpu.MemorySpace.VMEM),
        cost_estimate=pl.CostEstimate(flops=flops,
                                      transcendentals=2 * Cc,
                                      bytes_accessed=bytes_accessed),
    )(x, w1m, g1.reshape(1, Cc), be1.reshape(1, Cc),
      w2m, g2.reshape(1, Cc), be2.reshape(1, Cc))

    return jnp.transpose(out_nhwc, (0, 3, 1, 2))                     # NHWC -> NCHW


def init_params(key):
    ks = jax.random.split(key, 8)
    fan_in = 3 * 3 * C
    std = math.sqrt(2.0 / fan_in)
    w1 = jax.random.normal(ks[0], (3, 3, C, C), jnp.float32) * std   # HWIO
    b1 = 0.01 * jax.random.normal(ks[1], (C,), jnp.float32)
    g1 = 1.0 + 0.1 * jax.random.normal(ks[2], (C,), jnp.float32)
    be1 = 0.1 * jax.random.normal(ks[3], (C,), jnp.float32)
    w2 = jax.random.normal(ks[4], (3, 3, C, C), jnp.float32) * std
    b2 = 0.01 * jax.random.normal(ks[5], (C,), jnp.float32)
    g2 = 1.0 + 0.1 * jax.random.normal(ks[6], (C,), jnp.float32)
    be2 = 0.1 * jax.random.normal(ks[7], (C,), jnp.float32)
    return (w1, b1, g1, be1, w2, b2, g2, be2)


def reference_forward(x_nchw, params):
    """Pure-JAX reference mirroring the PyTorch forward (training-mode BN,
    conv biases INCLUDED — the kernel drops them because BN cancels them)."""
    w1, b1, g1, be1, w2, b2, g2, be2 = params
    x = jnp.transpose(x_nchw, (0, 2, 3, 1)).astype(jnp.float32)
    dn = ('NHWC', 'HWIO', 'NHWC')

    a = jax.nn.relu(x)
    h1 = jax.lax.conv_general_dilated(a, w1, (1, 1), ((1, 1), (1, 1)),
                                      dimension_numbers=dn) + b1
    m, v = jnp.mean(h1, axis=(0, 1, 2)), jnp.var(h1, axis=(0, 1, 2))
    h1 = jax.nn.relu((h1 - m) * g1 / jnp.sqrt(v + EPS) + be1)

    h2 = jax.lax.conv_general_dilated(h1, w2, (1, 1), ((1, 1), (1, 1)),
                                      dimension_numbers=dn) + b2
    m, v = jnp.mean(h2, axis=(0, 1, 2)), jnp.var(h2, axis=(0, 1, 2))
    h2 = (h2 - m) * g2 / jnp.sqrt(v + EPS) + be2

    out = jax.nn.relu(h2 + x)
    return jnp.transpose(out, (0, 3, 1, 2))


if __name__ == "__main__":
    key = jax.random.PRNGKey(0)
    kx, kp = jax.random.split(key)

    # small shapes consistent with the module: channels MUST be 64.
    N, H, W = 2, 8, 8
    x = jax.random.normal(kx, (N, C, H, W), jnp.float32)
    params = init_params(kp)

    out = resnet18_layer3_forward(x, params)
    out = jax.block_until_ready(out)

    ref = reference_forward(x, params)
    assert out.shape == (N, C, H, W)
    assert jnp.allclose(out, ref, rtol=1e-3, atol=1e-3), "mismatch vs JAX reference"

    print("KERNEL_OK")
</pallas_src>

<mosaic_0001>
module attributes {stable_mosaic.version = 11 : i64} {
  func.func @resnet_layer3_kernel(%arg0: memref<2x8x8x64xf32, #tpu.memory_space<vmem>>, %arg1: memref<576x64xf32, #tpu.memory_space<vmem>>, %arg2: memref<1x64xf32, #tpu.memory_space<vmem>>, %arg3: memref<1x64xf32, #tpu.memory_space<vmem>>, %arg4: memref<576x64xf32, #tpu.memory_space<vmem>>, %arg5: memref<1x64xf32, #tpu.memory_space<vmem>>, %arg6: memref<1x64xf32, #tpu.memory_space<vmem>>, %arg7: memref<2x8x8x64xf32, #tpu.memory_space<vmem>>) attributes {dimension_semantics = [], scalar_prefetch = 0 : i64, scratch_operands = 0 : i64, tpu.core_type = #tpu.core_type<tc>} {
    %c0 = arith.constant 0 : index
    %c0_0 = arith.constant 0 : index
    %c0_1 = arith.constant 0 : index
    %c0_2 = arith.constant 0 : index
    %0 = vector.load %arg0[%c0, %c0_0, %c0_1, %c0_2] : memref<2x8x8x64xf32, #tpu.memory_space<vmem>>, vector<2x8x8x64xf32>
    %1 = vector.shape_cast %0 : vector<2x8x8x64xf32> to vector<128x64xf32>
    %cst = arith.constant 0.000000e+00 : f32
    %2 = vector.broadcast %cst : f32 to vector<2x8x8x64xf32>
    %3 = arith.maximumf %0, %2 : vector<2x8x8x64xf32>
    %cst_3 = arith.constant 0.000000e+00 : f32
    %4 = vector.broadcast %cst_3 : f32 to vector<2x8x1x64xf32>
    %5 = tpu.concatenate %4, %3, %4 in 2 : vector<2x8x1x64xf32>, vector<2x8x8x64xf32>, vector<2x8x1x64xf32> -> vector<2x8x10x64xf32>
    %cst_4 = arith.constant 0.000000e+00 : f32
    %6 = vector.broadcast %cst_4 : f32 to vector<2x1x10x64xf32>
    %7 = tpu.concatenate %6, %5, %6 in 1 : vector<2x1x10x64xf32>, vector<2x8x10x64xf32>, vector<2x1x10x64xf32> -> vector<2x10x10x64xf32>
    %8 = vector.extract_strided_slice %7 {offsets = [0, 0, 0, 0], sizes = [2, 8, 8, 64], strides = [1, 1, 1, 1]} : vector<2x10x10x64xf32> to vector<2x8x8x64xf32>
    %9 = vector.extract_strided_slice %7 {offsets = [0, 0, 1, 0], sizes = [2, 8, 8, 64], strides = [1, 1, 1, 1]} : vector<2x10x10x64xf32> to vector<2x8x8x64xf32>
    %10 = vector.extract_strided_slice %7 {offsets = [0, 0, 2, 0], sizes = [2, 8, 8, 64], strides = [1, 1, 1, 1]} : vector<2x10x10x64xf32> to vector<2x8x8x64xf32>
    %11 = vector.extract_strided_slice %7 {offsets = [0, 1, 0, 0], sizes = [2, 8, 8, 64], strides = [1, 1, 1, 1]} : vector<2x10x10x64xf32> to vector<2x8x8x64xf32>
    %12 = vector.extract_strided_slice %7 {offsets = [0, 1, 1, 0], sizes = [2, 8, 8, 64], strides = [1, 1, 1, 1]} : vector<2x10x10x64xf32> to vector<2x8x8x64xf32>
    %13 = vector.extract_strided_slice %7 {offsets = [0, 1, 2, 0], sizes = [2, 8, 8, 64], strides = [1, 1, 1, 1]} : vector<2x10x10x64xf32> to vector<2x8x8x64xf32>
    %14 = vector.extract_strided_slice %7 {offsets = [0, 2, 0, 0], sizes = [2, 8, 8, 64], strides = [1, 1, 1, 1]} : vector<2x10x10x64xf32> to vector<2x8x8x64xf32>
    %15 = vector.extract_strided_slice %7 {offsets = [0, 2, 1, 0], sizes = [2, 8, 8, 64], strides = [1, 1, 1, 1]} : vector<2x10x10x64xf32> to vector<2x8x8x64xf32>
    %16 = vector.extract_strided_slice %7 {offsets = [0, 2, 2, 0], sizes = [2, 8, 8, 64], strides = [1, 1, 1, 1]} : vector<2x10x10x64xf32> to vector<2x8x8x64xf32>
    %17 = tpu.concatenate %8, %9, %10, %11, %12, %13, %14, %15, %16 in 3 : vector<2x8x8x64xf32>, vector<2x8x8x64xf32>, vector<2x8x8x64xf32>, vector<2x8x8x64xf32>, vector<2x8x8x64xf32>, vector<2x8x8x64xf32>, vector<2x8x8x64xf32>, vector<2x8x8x64xf32>, vector<2x8x8x64xf32> -> vector<2x8x8x576xf32>
    %18 = vector.shape_cast %17 : vector<2x8x8x576xf32> to vector<128x576xf32>
    %c0_5 = arith.constant 0 : index
    %c0_6 = arith.constant 0 : index
    %19 = vector.load %arg1[%c0_5, %c0_6] : memref<576x64xf32, #tpu.memory_space<vmem>>, vector<576x64xf32>
    %cst_7 = arith.constant dense<0.000000e+00> : vector<128x64xf32>
    %20 = tpu.matmul %18, %19, %cst_7 {dimension_numbers = #tpu.dot_dimension_numbers<[1], [0], [0], [1], [0, 0, 1, 1], [], []>} : vector<128x576xf32>, vector<576x64xf32>, vector<128x64xf32> -> vector<128x64xf32>
    %c0_8 = arith.constant 0 : index
    %c0_9 = arith.constant 0 : index
    %21 = vector.load %arg2[%c0_8, %c0_9] : memref<1x64xf32, #tpu.memory_space<vmem>>, vector<1x64xf32>
    %c0_10 = arith.constant 0 : index
    %c0_11 = arith.constant 0 : index
    %22 = vector.load %arg3[%c0_10, %c0_11] : memref<1x64xf32, #tpu.memory_space<vmem>>, vector<1x64xf32>
    %cst_12 = arith.constant dense<0.000000e+00> : vector<64xf32>
    %23 = vector.multi_reduction <add>, %20, %cst_12 [0] : vector<128x64xf32> to vector<64xf32>
    %24 = vector.shape_cast %23 : vector<64xf32> to vector<1x64xf32>
    %cst_13 = arith.constant 1.280000e+02 : f32
    %25 = vector.broadcast %cst_13 : f32 to vector<1x64xf32>
    %26 = arith.divf %24, %25 : vector<1x64xf32>
    %27 = vector.broadcast %26 : vector<1x64xf32> to vector<128x64xf32>
    %28 = arith.subf %20, %27 : vector<128x64xf32>
    %29 = arith.mulf %28, %28 : vector<128x64xf32>
    %cst_14 = arith.constant dense<0.000000e+00> : vector<64xf32>
    %30 = vector.multi_reduction <add>, %29, %cst_14 [0] : vector<128x64xf32> to vector<64xf32>
    %31 = vector.shape_cast %30 : vector<64xf32> to vector<1x64xf32>
    %cst_15 = arith.constant 1.280000e+02 : f32
    %32 = vector.broadcast %cst_15 : f32 to vector<1x64xf32>
    %33 = arith.divf %31, %32 : vector<1x64xf32>
    %cst_16 = arith.constant 9.99999974E-6 : f32
    %34 = vector.broadcast %cst_16 : f32 to vector<1x64xf32>
    %35 = arith.addf %33, %34 : vector<1x64xf32>
    %36 = math.rsqrt %35 : vector<1x64xf32>
    %37 = arith.mulf %21, %36 : vector<1x64xf32>
    %38 = arith.mulf %26, %37 : vector<1x64xf32>
    %39 = arith.subf %22, %38 : vector<1x64xf32>
    %40 = vector.broadcast %37 : vector<1x64xf32> to vector<128x64xf32>
    %41 = arith.mulf %20, %40 : vector<128x64xf32>
    %42 = vector.broadcast %39 : vector<1x64xf32> to vector<128x64xf32>
    %43 = arith.addf %41, %42 : vector<128x64xf32>
    %cst_17 = arith.constant 0.000000e+00 : f32
    %44 = vector.broadcast %cst_17 : f32 to vector<128x64xf32>
    %45 = arith.maximumf %43, %44 : vector<128x64xf32>
    %46 = vector.shape_cast %45 : vector<128x64xf32> to vector<2x8x8x64xf32>
    %cst_18 = arith.constant 0.000000e+00 : f32
    %47 = vector.broadcast %cst_18 : f32 to vector<2x8x1x64xf32>
    %48 = tpu.concatenate %47, %46, %47 in 2 : vector<2x8x1x64xf32>, vector<2x8x8x64xf32>, vector<2x8x1x64xf32> -> vector<2x8x10x64xf32>
    %cst_19 = arith.constant 0.000000e+00 : f32
    %49 = vector.broadcast %cst_19 : f32 to vector<2x1x10x64xf32>
    %50 = tpu.concatenate %49, %48, %49 in 1 : vector<2x1x10x64xf32>, vector<2x8x10x64xf32>, vector<2x1x10x64xf32> -> vector<2x10x10x64xf32>
    %51 = vector.extract_strided_slice %50 {offsets = [0, 0, 0, 0], sizes = [2, 8, 8, 64], strides = [1, 1, 1, 1]} : vector<2x10x10x64xf32> to vector<2x8x8x64xf32>
    %52 = vector.extract_strided_slice %50 {offsets = [0, 0, 1, 0], sizes = [2, 8, 8, 64], strides = [1, 1, 1, 1]} : vector<2x10x10x64xf32> to vector<2x8x8x64xf32>
    %53 = vector.extract_strided_slice %50 {offsets = [0, 0, 2, 0], sizes = [2, 8, 8, 64], strides = [1, 1, 1, 1]} : vector<2x10x10x64xf32> to vector<2x8x8x64xf32>
    %54 = vector.extract_strided_slice %50 {offsets = [0, 1, 0, 0], sizes = [2, 8, 8, 64], strides = [1, 1, 1, 1]} : vector<2x10x10x64xf32> to vector<2x8x8x64xf32>
    %55 = vector.extract_strided_slice %50 {offsets = [0, 1, 1, 0], sizes = [2, 8, 8, 64], strides = [1, 1, 1, 1]} : vector<2x10x10x64xf32> to vector<2x8x8x64xf32>
    %56 = vector.extract_strided_slice %50 {offsets = [0, 1, 2, 0], sizes = [2, 8, 8, 64], strides = [1, 1, 1, 1]} : vector<2x10x10x64xf32> to vector<2x8x8x64xf32>
    %57 = vector.extract_strided_slice %50 {offsets = [0, 2, 0, 0], sizes = [2, 8, 8, 64], strides = [1, 1, 1, 1]} : vector<2x10x10x64xf32> to vector<2x8x8x64xf32>
    %58 = vector.extract_strided_slice %50 {offsets = [0, 2, 1, 0], sizes = [2, 8, 8, 64], strides = [1, 1, 1, 1]} : vector<2x10x10x64xf32> to vector<2x8x8x64xf32>
    %59 = vector.extract_strided_slice %50 {offsets = [0, 2, 2, 0], sizes = [2, 8, 8, 64], strides = [1, 1, 1, 1]} : vector<2x10x10x64xf32> to vector<2x8x8x64xf32>
    %60 = tpu.concatenate %51, %52, %53, %54, %55, %56, %57, %58, %59 in 3 : vector<2x8x8x64xf32>, vector<2x8x8x64xf32>, vector<2x8x8x64xf32>, vector<2x8x8x64xf32>, vector<2x8x8x64xf32>, vector<2x8x8x64xf32>, vector<2x8x8x64xf32>, vector<2x8x8x64xf32>, vector<2x8x8x64xf32> -> vector<2x8x8x576xf32>
    %61 = vector.shape_cast %60 : vector<2x8x8x576xf32> to vector<128x576xf32>
    %c0_20 = arith.constant 0 : index
    %c0_21 = arith.constant 0 : index
    %62 = vector.load %arg4[%c0_20, %c0_21] : memref<576x64xf32, #tpu.memory_space<vmem>>, vector<576x64xf32>
    %cst_22 = arith.constant dense<0.000000e+00> : vector<128x64xf32>
    %63 = tpu.matmul %61, %62, %cst_22 {dimension_numbers = #tpu.dot_dimension_numbers<[1], [0], [0], [1], [0, 0, 1, 1], [], []>} : vector<128x576xf32>, vector<576x64xf32>, vector<128x64xf32> -> vector<128x64xf32>
    %c0_23 = arith.constant 0 : index
    %c0_24 = arith.constant 0 : index
    %64 = vector.load %arg5[%c0_23, %c0_24] : memref<1x64xf32, #tpu.memory_space<vmem>>, vector<1x64xf32>
    %c0_25 = arith.constant 0 : index
    %c0_26 = arith.constant 0 : index
    %65 = vector.load %arg6[%c0_25, %c0_26] : memref<1x64xf32, #tpu.memory_space<vmem>>, vector<1x64xf32>
    %cst_27 = arith.constant dense<0.000000e+00> : vector<64xf32>
    %66 = vector.multi_reduction <add>, %63, %cst_27 [0] : vector<128x64xf32> to vector<64xf32>
    %67 = vector.shape_cast %66 : vector<64xf32> to vector<1x64xf32>
    %cst_28 = arith.constant 1.280000e+02 : f32
    %68 = vector.broadcast %cst_28 : f32 to vector<1x64xf32>
    %69 = arith.divf %67, %68 : vector<1x64xf32>
    %70 = vector.broadcast %69 : vector<1x64xf32> to vector<128x64xf32>
    %71 = arith.subf %63, %70 : vector<128x64xf32>
    %72 = arith.mulf %71, %71 : vector<128x64xf32>
    %cst_29 = arith.constant dense<0.000000e+00> : vector<64xf32>
    %73 = vector.multi_reduction <add>, %72, %cst_29 [0] : vector<128x64xf32> to vector<64xf32>
    %74 = vector.shape_cast %73 : vector<64xf32> to vector<1x64xf32>
    %cst_30 = arith.constant 1.280000e+02 : f32
    %75 = vector.broadcast %cst_30 : f32 to vector<1x64xf32>
    %76 = arith.divf %74, %75 : vector<1x64xf32>
    %cst_31 = arith.constant 9.99999974E-6 : f32
    %77 = vector.broadcast %cst_31 : f32 to vector<1x64xf32>
    %78 = arith.addf %76, %77 : vector<1x64xf32>
    %79 = math.rsqrt %78 : vector<1x64xf32>
    %80 = arith.mulf %64, %79 : vector<1x64xf32>
    %81 = arith.mulf %69, %80 : vector<1x64xf32>
    %82 = arith.subf %65, %81 : vector<1x64xf32>
    %83 = vector.broadcast %80 : vector<1x64xf32> to vector<128x64xf32>
    %84 = arith.mulf %63, %83 : vector<128x64xf32>
    %85 = vector.broadcast %82 : vector<1x64xf32> to vector<128x64xf32>
    %86 = arith.addf %84, %85 : vector<128x64xf32>
    %87 = arith.addf %86, %1 : vector<128x64xf32>
    %cst_32 = arith.constant 0.000000e+00 : f32
    %88 = vector.broadcast %cst_32 : f32 to vector<128x64xf32>
    %89 = arith.maximumf %87, %88 : vector<128x64xf32>
    %90 = vector.shape_cast %89 : vector<128x64xf32> to vector<2x8x8x64xf32>
    %c0_33 = arith.constant 0 : index
    %c0_34 = arith.constant 0 : index
    %c0_35 = arith.constant 0 : index
    %c0_36 = arith.constant 0 : index
    %91 = vector.load %arg7[%c0_33, %c0_34, %c0_35, %c0_36] : memref<2x8x8x64xf32, #tpu.memory_space<vmem>>, vector<2x8x8x64xf32>
    tpu.vector_store %arg7[%c0_33, %c0_34, %c0_35, %c0_36], %90 {strides = array<i32>} : memref<2x8x8x64xf32, #tpu.memory_space<vmem>>, vector<2x8x8x64xf32>,
    return
  }
}

</mosaic_0001>

<llo_original>
// kernel: resnet18_layer3_forward.1
$region0: #{resnet18_layer3_forward.1}
  #allocation0 [shape = 'u32[]', space=smem, size = 0x4, offset = 0x4, fixed_abs, tag = 'smem constant byte address 0x4 - core index']
  #allocation1 [shape = 'u32[144,128]{1,0:T(1,128)}', space=vmem, size = 0x12000, scoped, tag = 'internal scratch']
  %s0 = inlined_call_operand.hbm [shape: f32[2,8,8,64], index: 0, kind: input, shape index: {}]
  %s1 = inlined_call_operand.hbm [shape: f32[576,64], index: 1, kind: input, shape index: {}]
  %s2 = inlined_call_operand.vmem [shape: f32[1,64], index: 2, kind: input, shape index: {}]
  %s3 = inlined_call_operand.vmem [shape: f32[1,64], index: 3, kind: input, shape index: {}]
  %s4 = inlined_call_operand.hbm [shape: f32[576,64], index: 4, kind: input, shape index: {}]
  %s5 = inlined_call_operand.vmem [shape: f32[1,64], index: 5, kind: input, shape index: {}]
  %s6 = inlined_call_operand.vmem [shape: f32[1,64], index: 6, kind: input, shape index: {}]
  %s7 = inlined_call_operand.hbm [shape: f32[2,8,8,64], index: 7, kind: output, shape index: {}]
  %s8 = sld [smem:[#allocation0]]
  $region50: #{resnet18_layer3_forward.1} parent=0
    _
  %s10 = ssub.s32 1, %s8
  %s11 = scalar_select 0, %s10, %s8
  $region1: #{resnet18_layer3_forward.1} parent=0
    #allocation2 [shape = 'u8[65536]{0}', space=vmem, size = 0x10000, scoped, tag = 'input window, operand 0, single buffered']
    #allocation3 [shape = 's32[1]{0}', space=sflag, size = 0x4, scoped, tag = 'scoped memory for resnet18_layer3_forward.1']
    #allocation4 [shape = 's32[1]{0}', space=sflag, size = 0x4, scoped, tag = 'scoped memory for resnet18_layer3_forward.1']
    #allocation5 [shape = 'u8[294912]{0}', space=vmem, size = 0x48000, scoped, tag = 'input window, operand 1, single buffered']
    #allocation6 [shape = 's32[1]{0}', space=sflag, size = 0x4, scoped, tag = 'scoped memory for resnet18_layer3_forward.1']
    #allocation7 [shape = 'u8[294912]{0}', space=vmem, size = 0x48000, scoped, tag = 'input window, operand 4, single buffered']
    #allocation8 [shape = 'u8[65536]{0}', space=vmem, size = 0x10000, scoped, tag = 'output window, operand 0, single buffered']
    %12 = vsyncpa [#allocation3], 0
    %13 = vsyncpa [#allocation6], 0
    %14 = vsyncpa [#allocation4], 0
    // Predicated region
    $region2: #{resnet18_layer3_forward.1} parent=1 // pred_check
      _
    $region3: #{resnet18_layer3_forward.1} parent=1 // pred_check_branch
      %16 = sbr.rel (0) target = $region5
    $region4: #{resnet18_layer3_forward.1} parent=1 // pred_region
      %s18 = ssub.s32 2048, 2048
      %19 = vsyncadd [#allocation3], %s18
      %s20 = sshll.u32 [#allocation2], 4
      %s21 = int_to_ptr.vmem [resolvable:$true] %s20
      %26 = dma.hbm_to_vmem [thread:$0]  %s0, 2048, %s21, [#allocation3], 128, 128, 8
    $region5: #{resnet18_layer3_forward.1} parent=1 // pred_fallthru
      _
    // Predicated region
    $region6: #{resnet18_layer3_forward.1} parent=1 // pred_check
      _
    $region7: #{resnet18_layer3_forward.1} parent=1 // pred_check_branch
      %28 = sbr.rel (0) target = $region9
    $region8: #{resnet18_layer3_forward.1} parent=1 // pred_region
      %s30 = ssub.s32 9216, 9216
      %31 = vsyncadd [#allocation6], %s30
      %s32 = sshll.u32 [#allocation5], 4
      %s33 = int_to_ptr.vmem [resolvable:$true] %s32
      %38 = dma.hbm_to_vmem [thread:$0]  %s1, 9216, %s33, [#allocation6], 128, 128, 8
    $region9: #{resnet18_layer3_forward.1} parent=1 // pred_fallthru
      _
    // Predicated region
    $region10: #{resnet18_layer3_forward.1} parent=1 // pred_check
      _
    $region11: #{resnet18_layer3_forward.1} parent=1 // pred_check_branch
      %40 = sbr.rel (0) target = $region13
    $region12: #{resnet18_layer3_forward.1} parent=1 // pred_region
      _
    $region13: #{resnet18_layer3_forward.1} parent=1 // pred_fallthru
      _
    // Predicated region
    $region14: #{resnet18_layer3_forward.1} parent=1 // pred_check
      _
    $region15: #{resnet18_layer3_forward.1} parent=1 // pred_check_branch
      %42 = sbr.rel (0) target = $region17
    $region16: #{resnet18_layer3_forward.1} parent=1 // pred_region
      _
    $region17: #{resnet18_layer3_forward.1} parent=1 // pred_fallthru
      _
    // Predicated region
    $region18: #{resnet18_layer3_forward.1} parent=1 // pred_check
      _
    $region19: #{resnet18_layer3_forward.1} parent=1 // pred_check_branch
      %44 = sbr.rel (0) target = $region21
    $region20: #{resnet18_layer3_forward.1} parent=1 // pred_region
      %s46 = ssub.s32 9216, 9216
      %47 = vsyncadd [#allocation6], %s46
      %s48 = sshll.u32 [#allocation7], 4
      %s49 = int_to_ptr.vmem [resolvable:$true] %s48
      %54 = dma.hbm_to_vmem [thread:$0]  %s4, 9216, %s49, [#allocation6], 128, 128, 8
    $region21: #{resnet18_layer3_forward.1} parent=1 // pred_fallthru
      _
    // Predicated region
    $region22: #{resnet18_layer3_forward.1} parent=1 // pred_check
      _
    $region23: #{resnet18_layer3_forward.1} parent=1 // pred_check_branch
      %56 = sbr.rel (0) target = $region25
    $region24: #{resnet18_layer3_forward.1} parent=1 // pred_region
      _
    $region25: #{resnet18_layer3_forward.1} parent=1 // pred_fallthru
      _
    // Predicated region
    $region26: #{resnet18_layer3_forward.1} parent=1 // pred_check
      _
    $region27: #{resnet18_layer3_forward.1} parent=1 // pred_check_branch
      %58 = sbr.rel (0) target = $region29
    $region28: #{resnet18_layer3_forward.1} parent=1 // pred_region
      _
    $region29: #{resnet18_layer3_forward.1} parent=1 // pred_fallthru
      _
    // Predicated region
    $region30: #{resnet18_layer3_forward.1} parent=1 // pred_check
      _
    $region31: #{resnet18_layer3_forward.1} parent=1 // pred_check_branch
      %60 = sbr.rel (0) target = $region33
    $region32: #{resnet18_layer3_forward.1} parent=1 // pred_region
      %61 = dma.done [#allocation3], 2048
    $region33: #{resnet18_layer3_forward.1} parent=1 // pred_fallthru
      _
    // Predicated region
    $region34: #{resnet18_layer3_forward.1} parent=1 // pred_check
      _
    $region35: #{resnet18_layer3_forward.1} parent=1 // pred_check_branch
      %63 = sbr.rel (0) target = $region37
    $region36: #{resnet18_layer3_forward.1} parent=1 // pred_region
      %64 = dma.done [#allocation6], 9216
    $region37: #{resnet18_layer3_forward.1} parent=1 // pred_fallthru
      _
    // Predicated region
    $region38: #{resnet18_layer3_forward.1} parent=1 // pred_check
      _
    $region39: #{resnet18_layer3_forward.1} parent=1 // pred_check_branch
      %66 = sbr.rel (0) target = $region41
    $region40: #{resnet18_layer3_forward.1} parent=1 // pred_region
      %67 = dma.done [#allocation6], 9216
    $region41: #{resnet18_layer3_forward.1} parent=1 // pred_fallthru
      _
    %v68 = vld [vmem:[#allocation2] sm:$0xff]
    %v69 = vld [vmem:[#allocation2 + $0x8] sm:$0xff]
    %v70 = vld [vmem:[#allocation2 + $0x10] sm:$0xff]
    %v71 = vld [vmem:[#allocation2 + $0x18] sm:$0xff]
    %v72 = vld [vmem:[#allocation2 + $0x20] sm:$0xff]
    %v73 = vld [vmem:[#allocation2 + $0x28] sm:$0xff]
    %v74 = vld [vmem:[#allocation2 + $0x30] sm:$0xff]
    %v75 = vld [vmem:[#allocation2 + $0x38] sm:$0xff]
    %v76 = vld [vmem:[#allocation2 + $0x40] sm:$0xff]
    %v77 = vld [vmem:[#allocation2 + $0x48] sm:$0xff]
    %v78 = vld [vmem:[#allocation2 + $0x50] sm:$0xff]
    %v79 = vld [vmem:[#allocation2 + $0x58] sm:$0xff]
    %v80 = vld [vmem:[#allocation2 + $0x60] sm:$0xff]
    %v81 = vld [vmem:[#allocation2 + $0x68] sm:$0xff]
    %v82 = vld [vmem:[#allocation2 + $0x70] sm:$0xff]
    %v83 = vld [vmem:[#allocation2 + $0x78] sm:$0xff]
    %v84 = vmax.f32 %v68, 0.0
    %v85 = vmax.f32 %v69, 0.0
    %v86 = vmax.f32 %v70, 0.0
    %v87 = vmax.f32 %v71, 0.0
    %v88 = vmax.f32 %v72, 0.0
    %v89 = vmax.f32 %v73, 0.0
    %v90 = vmax.f32 %v74, 0.0
    %v91 = vmax.f32 %v75, 0.0
    %v92 = vmax.f32 %v76, 0.0
    %v93 = vmax.f32 %v77, 0.0
    %v94 = vmax.f32 %v78, 0.0
    %v95 = vmax.f32 %v79, 0.0
    %v96 = vmax.f32 %v80, 0.0
    %v97 = vmax.f32 %v81, 0.0
    %v98 = vmax.f32 %v82, 0.0
    %v99 = vmax.f32 %v83, 0.0
    %v116 = vrot.slane %v84, 7
    %v117 = vrot.slane %v85, 7
    %v118 = vrot.slane %v86, 7
    %v119 = vrot.slane %v87, 7
    %v120 = vrot.slane %v88, 7
    %v121 = vrot.slane %v89, 7
    %v122 = vrot.slane %v90, 7
    %v123 = vrot.slane %v91, 7
    %v124 = vrot.slane %v92, 7
    %v125 = vrot.slane %v93, 7
    %v126 = vrot.slane %v94, 7
    %v127 = vrot.slane %v95, 7
    %v128 = vrot.slane %v96, 7
    %v129 = vrot.slane %v97, 7
    %v130 = vrot.slane %v98, 7
    %v131 = vrot.slane %v99, 7
    %vm148 = vcmask 1040384
    %v149 = vsel %vm148, 0.0, %v116
    %v150 = vsel %vm148, 0.0, %v117
    %v151 = vsel %vm148, 0.0, %v118
    %v152 = vsel %vm148, 0.0, %v119
    %v153 = vsel %vm148, 0.0, %v120
    %v154 = vsel %vm148, 0.0, %v121
    %v155 = vsel %vm148, 0.0, %v122
    %v156 = vsel %vm148, 0.0, %v123
    %v157 = vsel %vm148, 0.0, %v124
    %v158 = vsel %vm148, 0.0, %v125
    %v159 = vsel %vm148, 0.0, %v126
    %v160 = vsel %vm148, 0.0, %v127
    %v161 = vsel %vm148, 0.0, %v128
    %v162 = vsel %vm148, 0.0, %v129
    %v163 = vsel %vm148, 0.0, %v130
    %v164 = vsel %vm148, 0.0, %v131
    %v165 = vsel %vm148, %v116, 0.0
    %v166 = vsel %vm148, %v117, 0.0
    %v167 = vsel %vm148, %v118, 0.0
    %v168 = vsel %vm148, %v119, 0.0
    %v169 = vsel %vm148, %v120, 0.0
    %v170 = vsel %vm148, %v121, 0.0
    %v171 = vsel %vm148, %v122, 0.0
    %v172 = vsel %vm148, %v123, 0.0
    %v173 = vsel %vm148, %v124, 0.0
    %v174 = vsel %vm148, %v125, 0.0
    %v175 = vsel %vm148, %v126, 0.0
    %v176 = vsel %vm148, %v127, 0.0
    %v177 = vsel %vm148, %v128, 0.0
    %v178 = vsel %vm148, %v129, 0.0
    %v179 = vsel %vm148, %v130, 0.0
    %v180 = vsel %vm148, %v131, 0.0
    %vm210 = vcmask 1046528
    %v211 = vrot.slane 0.0, 1
    %v212 = vsel %vm210, %v211, %v211
    %v213 = vrot.slane %v149, 1
    %v214 = vrot.slane %v165, 1
    %v215 = vsel %vm210, %v213, %v214
    %v216 = vrot.slane %v150, 1
    %v217 = vrot.slane %v166, 1
    %v218 = vsel %vm210, %v216, %v217
    %v219 = vrot.slane %v151, 1
    %v220 = vrot.slane %v167, 1
    %v221 = vsel %vm210, %v219, %v220
    %v222 = vrot.slane %v152, 1
    %v223 = vrot.slane %v168, 1
    %v224 = vsel %vm210, %v222, %v223
    %v225 = vrot.slane %v153, 1
    %v226 = vrot.slane %v169, 1
    %v227 = vsel %vm210, %v225, %v226
    %v228 = vrot.slane %v154, 1
    %v229 = vrot.slane %v170, 1
    %v230 = vsel %vm210, %v228, %v229
    %v231 = vrot.slane %v155, 1
    %v232 = vrot.slane %v171, 1
    %v233 = vsel %vm210, %v231, %v232
    %v234 = vrot.slane %v157, 1
    %v235 = vrot.slane %v173, 1
    %v236 = vsel %vm210, %v234, %v235
    %v237 = vrot.slane %v158, 1
    %v238 = vrot.slane %v174, 1
    %v239 = vsel %vm210, %v237, %v238
    %v240 = vrot.slane %v159, 1
    %v241 = vrot.slane %v175, 1
    %v242 = vsel %vm210, %v240, %v241
    %v243 = vrot.slane %v160, 1
    %v244 = vrot.slane %v176, 1
    %v245 = vsel %vm210, %v243, %v244
    %v246 = vrot.slane %v161, 1
    %v247 = vrot.slane %v177, 1
    %v248 = vsel %vm210, %v246, %v247
    %v249 = vrot.slane %v162, 1
    %v250 = vrot.slane %v178, 1
    %v251 = vsel %vm210, %v249, %v250
    %v252 = vrot.slane %v163, 1
    %v253 = vrot.slane %v179, 1
    %v254 = vsel %vm210, %v252, %v253
    %255 = vrot.lane.b32.xlu0 %v212, 64
    %v256 = vpop.permute.xlu0 %255
    %257 = vrot.lane.b32.xlu0 %v215, 64
    %v258 = vpop.permute.xlu0 %257
    %259 = vrot.lane.b32.xlu0 %v218, 64
    %v260 = vpop.permute.xlu0 %259
    %261 = vrot.lane.b32.xlu0 %v221, 64
    %v262 = vpop.permute.xlu0 %261
    %263 = vrot.lane.b32.xlu0 %v224, 64
    %v264 = vpop.permute.xlu0 %263
    %265 = vrot.lane.b32.xlu0 %v227, 64
    %v266 = vpop.permute.xlu0 %265
    %267 = vrot.lane.b32.xlu0 %v230, 64
    %v268 = vpop.permute.xlu0 %267
    %269 = vrot.lane.b32.xlu0 %v233, 64
    %v270 = vpop.permute.xlu0 %269
    %271 = vrot.lane.b32.xlu0 %v236, 64
    %v272 = vpop.permute.xlu0 %271
    %273 = vrot.lane.b32.xlu0 %v239, 64
    %v274 = vpop.permute.xlu0 %273
    %275 = vrot.lane.b32.xlu0 %v242, 64
    %v276 = vpop.permute.xlu0 %275
    %277 = vrot.lane.b32.xlu0 %v245, 64
    %v278 = vpop.permute.xlu0 %277
    %279 = vrot.lane.b32.xlu0 %v248, 64
    %v280 = vpop.permute.xlu0 %279
    %281 = vrot.lane.b32.xlu0 %v251, 64
    %v282 = vpop.permute.xlu0 %281
    %283 = vrot.lane.b32.xlu0 %v254, 64
    %v284 = vpop.permute.xlu0 %283
    %vm300 = vcmask 1045504
    %v301 = vrot.slane 0.0, 2
    %v302 = vsel %vm300, %v301, %v301
    %v303 = vrot.slane %v149, 2
    %v304 = vrot.slane %v165, 2
    %v305 = vsel %vm300, %v303, %v304
    %v306 = vrot.slane %v150, 2
    %v307 = vrot.slane %v166, 2
    %v308 = vsel %vm300, %v306, %v307
    %v309 = vrot.slane %v151, 2
    %v310 = vrot.slane %v167, 2
    %v311 = vsel %vm300, %v309, %v310
    %v312 = vrot.slane %v152, 2
    %v313 = vrot.slane %v168, 2
    %v314 = vsel %vm300, %v312, %v313
    %v315 = vrot.slane %v153, 2
    %v316 = vrot.slane %v169, 2
    %v317 = vsel %vm300, %v315, %v316
    %v318 = vrot.slane %v154, 2
    %v319 = vrot.slane %v170, 2
    %v320 = vsel %vm300, %v318, %v319
    %v321 = vrot.slane %v155, 2
    %v322 = vrot.slane %v171, 2
    %v323 = vsel %vm300, %v321, %v322
    %v324 = vrot.slane %v157, 2
    %v325 = vrot.slane %v173, 2
    %v326 = vsel %vm300, %v324, %v325
    %v327 = vrot.slane %v158, 2
    %v328 = vrot.slane %v174, 2
    %v329 = vsel %vm300, %v327, %v328
    %v330 = vrot.slane %v159, 2
    %v331 = vrot.slane %v175, 2
    %v332 = vsel %vm300, %v330, %v331
    %v333 = vrot.slane %v160, 2
    %v334 = vrot.slane %v176, 2
    %v335 = vsel %vm300, %v333, %v334
    %v336 = vrot.slane %v161, 2
    %v337 = vrot.slane %v177, 2
    %v338 = vsel %vm300, %v336, %v337
    %v339 = vrot.slane %v162, 2
    %v340 = vrot.slane %v178, 2
    %v341 = vsel %vm300, %v339, %v340
    %v342 = vrot.slane %v163, 2
    %v343 = vrot.slane %v179, 2
    %v344 = vsel %vm300, %v342, %v343
    %362 = vrot.lane.b32.xlu0 %v149, 64
    %v363 = vpop.permute.xlu0 %362
    %364 = vrot.lane.b32.xlu0 %v150, 64
    %v365 = vpop.permute.xlu0 %364
    %366 = vrot.lane.b32.xlu0 %v151, 64
    %v367 = vpop.permute.xlu0 %366
    %368 = vrot.lane.b32.xlu0 %v152, 64
    %v369 = vpop.permute.xlu0 %368
    %370 = vrot.lane.b32.xlu0 %v153, 64
    %v371 = vpop.permute.xlu0 %370
    %372 = vrot.lane.b32.xlu0 %v154, 64
    %v373 = vpop.permute.xlu0 %372
    %374 = vrot.lane.b32.xlu0 %v155, 64
    %v375 = vpop.permute.xlu0 %374
    %376 = vrot.lane.b32.xlu0 %v156, 64
    %v377 = vpop.permute.xlu0 %376
    %378 = vrot.lane.b32.xlu0 %v157, 64
    %v379 = vpop.permute.xlu0 %378
    %380 = vrot.lane.b32.xlu0 %v158, 64
    %v381 = vpop.permute.xlu0 %380
    %382 = vrot.lane.b32.xlu0 %v159, 64
    %v383 = vpop.permute.xlu0 %382
    %384 = vrot.lane.b32.xlu0 %v160, 64
    %v385 = vpop.permute.xlu0 %384
    %386 = vrot.lane.b32.xlu0 %v161, 64
    %v387 = vpop.permute.xlu0 %386
    %388 = vrot.lane.b32.xlu0 %v162, 64
    %v389 = vpop.permute.xlu0 %388
    %390 = vrot.lane.b32.xlu0 %v163, 64
    %v391 = vpop.permute.xlu0 %390
    %392 = vrot.lane.b32.xlu0 %v164, 64
    %v393 = vpop.permute.xlu0 %392
    %v412 = vrot.slane %v156, 1
    %v413 = vrot.slane %v172, 1
    %v414 = vsel %vm210, %v412, %v413
    %v415 = vrot.slane %v164, 1
    %v416 = vrot.slane %v180, 1
    %v417 = vsel %vm210, %v415, %v416
    %v434 = vrot.slane %v156, 2
    %v435 = vrot.slane %v172, 2
    %v436 = vsel %vm300, %v434, %v435
    %v437 = vrot.slane %v164, 2
    %v438 = vrot.slane %v180, 2
    %v439 = vsel %vm300, %v437, %v438
    %440 = vrot.lane.b32.xlu0 %v305, 64
    %v441 = vpop.permute.xlu0 %440
    %442 = vrot.lane.b32.xlu0 %v308, 64
    %v443 = vpop.permute.xlu0 %442
    %444 = vrot.lane.b32.xlu0 %v311, 64
    %v445 = vpop.permute.xlu0 %444
    %446 = vrot.lane.b32.xlu0 %v314, 64
    %v447 = vpop.permute.xlu0 %446
    %448 = vrot.lane.b32.xlu0 %v317, 64
    %v449 = vpop.permute.xlu0 %448
    %450 = vrot.lane.b32.xlu0 %v320, 64
    %v451 = vpop.permute.xlu0 %450
    %452 = vrot.lane.b32.xlu0 %v323, 64
    %v453 = vpop.permute.xlu0 %452
    %454 = vrot.lane.b32.xlu0 %v436, 64
    %v455 = vpop.permute.xlu0 %454
    %456 = vrot.lane.b32.xlu0 %v326, 64
    %v457 = vpop.permute.xlu0 %456
    %458 = vrot.lane.b32.xlu0 %v329, 64
    %v459 = vpop.permute.xlu0 %458
    %460 = vrot.lane.b32.xlu0 %v332, 64
    %v461 = vpop.permute.xlu0 %460
    %462 = vrot.lane.b32.xlu0 %v335, 64
    %v463 = vpop.permute.xlu0 %462
    %464 = vrot.lane.b32.xlu0 %v338, 64
    %v465 = vpop.permute.xlu0 %464
    %466 = vrot.lane.b32.xlu0 %v341, 64
    %v467 = vpop.permute.xlu0 %466
    %468 = vrot.lane.b32.xlu0 %v344, 64
    %v469 = vpop.permute.xlu0 %468
    %470 = vrot.lane.b32.xlu0 %v439, 64
    %v471 = vpop.permute.xlu0 %470
    %488 = vrot.lane.b32.xlu0 %v414, 64
    %v489 = vpop.permute.xlu0 %488
    %490 = vrot.lane.b32.xlu0 %v417, 64
    %v491 = vpop.permute.xlu0 %490
    %vm494 = vcmask 523264
    %v495 = vsel %vm494, 0.0, %v256
    %v496 = vsel %vm494, %v149, %v258
    %v497 = vsel %vm494, %v150, %v260
    %v498 = vsel %vm494, %v151, %v262
    %v499 = vsel %vm494, %v152, %v264
    %v500 = vsel %vm494, %v153, %v266
    %v501 = vsel %vm494, %v154, %v268
    %v502 = vsel %vm494, %v155, %v270
    %v503 = vsel %vm494, %v157, %v272
    %v504 = vsel %vm494, %v158, %v274
    %v505 = vsel %vm494, %v159, %v276
    %v506 = vsel %vm494, %v160, %v278
    %v507 = vsel %vm494, %v161, %v280
    %v508 = vsel %vm494, %v162, %v282
    %v509 = vsel %vm494, %v163, %v284
    %v510 = vsel %vm494, %v302, %v363
    %v511 = vsel %vm494, %v305, %v365
    %v512 = vsel %vm494, %v308, %v367
    %v513 = vsel %vm494, %v311, %v369
    %v514 = vsel %vm494, %v314, %v371
    %v515 = vsel %vm494, %v317, %v373
    %v516 = vsel %vm494, %v320, %v375
    %v517 = vsel %vm494, %v323, %v377
    %v518 = vsel %vm494, %v302, %v379
    %v519 = vsel %vm494, %v326, %v381
    %v520 = vsel %vm494, %v329, %v383
    %v521 = vsel %vm494, %v332, %v385
    %v522 = vsel %vm494, %v335, %v387
    %v523 = vsel %vm494, %v338, %v389
    %v524 = vsel %vm494, %v341, %v391
    %v525 = vsel %vm494, %v344, %v393
    %v526 = vsel %vm494, %v215, %v441
    %v527 = vsel %vm494, %v218, %v443
    %v528 = vsel %vm494, %v221, %v445
    %v529 = vsel %vm494, %v224, %v447
    %v530 = vsel %vm494, %v227, %v449
    %v531 = vsel %vm494, %v230, %v451
    %v532 = vsel %vm494, %v233, %v453
    %v533 = vsel %vm494, %v414, %v455
    %v534 = vsel %vm494, %v236, %v457
    %v535 = vsel %vm494, %v239, %v459
    %v536 = vsel %vm494, %v242, %v461
    %v537 = vsel %vm494, %v245, %v463
    %v538 = vsel %vm494, %v248, %v465
    %v539 = vsel %vm494, %v251, %v467
    %v540 = vsel %vm494, %v254, %v469
    %v541 = vsel %vm494, %v417, %v471
    %v542 = vsel %vm494, %v156, %v489
    %v543 = vsel %vm494, %v164, %v491
    %v544 = vld [vmem:[#allocation5] sm:$0xff]
    %v545 = vld [vmem:[#allocation5 + $0x8] sm:$0xff]
    %v546 = vld [vmem:[#allocation5 + $0x10] sm:$0xff]
    %v547 = vld [vmem:[#allocation5 + $0x18] sm:$0xff]
    %v548 = vld [vmem:[#allocation5 + $0x20] sm:$0xff]
    %v549 = vld [vmem:[#allocation5 + $0x28] sm:$0xff]
    %v550 = vld [vmem:[#allocation5 + $0x30] sm:$0xff]
    %v551 = vld [vmem:[#allocation5 + $0x38] sm:$0xff]
    %v552 = vld [vmem:[#allocation5 + $0x40] sm:$0xff]
    %v553 = vld [vmem:[#allocation5 + $0x48] sm:$0xff]
    %v554 = vld [vmem:[#allocation5 + $0x50] sm:$0xff]
    %v555 = vld [vmem:[#allocation5 + $0x58] sm:$0xff]
    %v556 = vld [vmem:[#allocation5 + $0x60] sm:$0xff]
    %v557 = vld [vmem:[#allocation5 + $0x68] sm:$0xff]
    %v558 = vld [vmem:[#allocation5 + $0x70] sm:$0xff]
    %v559 = vld [vmem:[#allocation5 + $0x78] sm:$0xff]
    %v560 = vld [vmem:[#allocation5 + $0x80] sm:$0xff]
    %v561 = vld [vmem:[#allocation5 + $0x88] sm:$0xff]
    %v562 = vld [vmem:[#allocation5 + $0x90] sm:$0xff]
    %v563 = vld [vmem:[#allocation5 + $0x98] sm:$0xff]
    %v564 = vld [vmem:[#allocation5 + $0xa0] sm:$0xff]
    %v565 = vld [vmem:[#allocation5 + $0xa8] sm:$0xff]
    %v566 = vld [vmem:[#allocation5 + $0xb0] sm:$0xff]
    %v567 = vld [vmem:[#allocation5 + $0xb8] sm:$0xff]
    %v568 = vld [vmem:[#allocation5 + $0xc0] sm:$0xff]
    %v569 = vld [vmem:[#allocation5 + $0xc8] sm:$0xff]
    %v570 = vld [vmem:[#allocation5 + $0xd0] sm:$0xff]
    %v571 = vld [vmem:[#allocation5 + $0xd8] sm:$0xff]
    %v572 = vld [vmem:[#allocation5 + $0xe0] sm:$0xff]
    %v573 = vld [vmem:[#allocation5 + $0xe8] sm:$0xff]
    %v574 = vld [vmem:[#allocation5 + $0xf0] sm:$0xff]
    %v575 = vld [vmem:[#allocation5 + $0xf8] sm:$0xff]
    %v576 = vld [vmem:[#allocation5 + $0x100] sm:$0xff]
    %v577 = vld [vmem:[#allocation5 + $0x108] sm:$0xff]
    %v578 = vld [vmem:[#allocation5 + $0x110] sm:$0xff]
    %v579 = vld [vmem:[#allocation5 + $0x118] sm:$0xff]
    %v580 = vld [vmem:[#allocation5 + $0x120] sm:$0xff]
    %v581 = vld [vmem:[#allocation5 + $0x128] sm:$0xff]
    %v582 = vld [vmem:[#allocation5 + $0x130] sm:$0xff]
    %v583 = vld [vmem:[#allocation5 + $0x138] sm:$0xff]
    %v584 = vld [vmem:[#allocation5 + $0x140] sm:$0xff]
    %v585 = vld [vmem:[#allocation5 + $0x148] sm:$0xff]
    %v586 = vld [vmem:[#allocation5 + $0x150] sm:$0xff]
    %v587 = vld [vmem:[#allocation5 + $0x158] sm:$0xff]
    %v588 = vld [vmem:[#allocation5 + $0x160] sm:$0xff]
    %v589 = vld [vmem:[#allocation5 + $0x168] sm:$0xff]
    %v590 = vld [vmem:[#allocation5 + $0x170] sm:$0xff]
    %v591 = vld [vmem:[#allocation5 + $0x178] sm:$0xff]
    %v592 = vld [vmem:[#allocation5 + $0x180] sm:$0xff]
    %v593 = vld [vmem:[#allocation5 + $0x188] sm:$0xff]
    %v594 = vld [vmem:[#allocation5 + $0x190] sm:$0xff]
    %v595 = vld [vmem:[#allocation5 + $0x198] sm:$0xff]
    %v596 = vld [vmem:[#allocation5 + $0x1a0] sm:$0xff]
    %v597 = vld [vmem:[#allocation5 + $0x1a8] sm:$0xff]
    %v598 = vld [vmem:[#allocation5 + $0x1b0] sm:$0xff]
    %v599 = vld [vmem:[#allocation5 + $0x1b8] sm:$0xff]
    %v600 = vld [vmem:[#allocation5 + $0x1c0] sm:$0xff]
    %v601 = vld [vmem:[#allocation5 + $0x1c8] sm:$0xff]
    %v602 = vld [vmem:[#allocation5 + $0x1d0] sm:$0xff]
    %v603 = vld [vmem:[#allocation5 + $0x1d8] sm:$0xff]
    %v604 = vld [vmem:[#allocation5 + $0x1e0] sm:$0xff]
    %v605 = vld [vmem:[#allocation5 + $0x1e8] sm:$0xff]
    %v606 = vld [vmem:[#allocation5 + $0x1f0] sm:$0xff]
    %v607 = vld [vmem:[#allocation5 + $0x1f8] sm:$0xff]
    %v608 = vld [vmem:[#allocation5 + $0x200] sm:$0xff]
    %v609 = vld [vmem:[#allocation5 + $0x208] sm:$0xff]
    %v610 = vld [vmem:[#allocation5 + $0x210] sm:$0xff]
    %v611 = vld [vmem:[#allocation5 + $0x218] sm:$0xff]
    %v612 = vld [vmem:[#allocation5 + $0x220] sm:$0xff]
    %v613 = vld [vmem:[#allocation5 + $0x228] sm:$0xff]
    %v614 = vld [vmem:[#allocation5 + $0x230] sm:$0xff]
    %v615 = vld [vmem:[#allocation5 + $0x238] sm:$0xff]
    %v616 = vsel %vm494, %v308, 0
    %v618 = vsel %vm494, %v311, 0
    %v620 = vsel %vm494, %v314, 0
    %v622 = vsel %vm494, %v317, 0
    %v624 = vsel %vm494, %v320, 0
    %v626 = vsel %vm494, %v323, 0
    %v628 = vsel %vm494, %v436, 0
    %v630 = vsel %vm494, %v302, 0
    %v632 = vsel %vm494, %v329, 0
    %v634 = vsel %vm494, %v332, 0
    %v636 = vsel %vm494, %v335, 0
    %v638 = vsel %vm494, %v338, 0
    %v640 = vsel %vm494, %v341, 0
    %v642 = vsel %vm494, %v344, 0
    %v644 = vsel %vm494, %v439, 0
    %646 = vmatprep.subr.mxu0 0.0
    %647 = vmatpush1.msra.mxu0 %v544
    %648 = vmatprep.subr.mxu0 0.0
    %649 = vmatpush1.msra.mxu0 %v545
    %650 = vmatprep.subr.mxu0 0.0
    %651 = vmatpush1.msra.mxu0 %v546
    %652 = vmatprep.subr.mxu0 0.0
    %653 = vmatpush1.msra.mxu0 %v547
    %654 = vmatprep.subr.mxu0 0.0
    %655 = vmatpush1.msra.mxu0 %v548
    %656 = vmatprep.subr.mxu0 0.0
    %657 = vmatpush1.msra.mxu0 %v549
    %658 = vmatprep.subr.mxu0 0.0
    %659 = vmatpush1.msra.mxu0 %v550
    %660 = vmatprep.subr.mxu0 0.0
    %661 = vmatpush1.msra.mxu0 %v551
    %662 = vmatprep.subr.mxu0 0.0
    %663 = vmatpush1.msra.mxu0 %v552
    %664 = vmatprep.subr.mxu0 0.0
    %665 = vmatpush1.msra.mxu0 %v553
    %666 = vmatprep.subr.mxu0 0.0
    %667 = vmatpush1.msra.mxu0 %v554
    %668 = vmatprep.subr.mxu0 0.0
    %669 = vmatpush1.msra.mxu0 %v555
    %670 = vmatprep.subr.mxu0 0.0
    %671 = vmatpush1.msra.mxu0 %v556
    %672 = vmatprep.subr.mxu0 0.0
    %673 = vmatpush1.msra.mxu0 %v557
    %674 = vmatprep.subr.mxu0 0.0
    %675 = vmatpush1.msra.mxu0 %v558
    %676 = vmatprep.subr.mxu0 0.0
    %677 = vmatpush1.msra.mxu0 %v559
    %678 = vmatprep.subr.mxu0 0.0
    %679 = vmatpush1.msra.mxu0 %v560
    %680 = vmatprep.subr.mxu0 0.0
    %681 = vmatpush1.msra.mxu0 %v561
    %682 = vmatprep.subr.mxu0 0.0
    %683 = vmatpush1.msra.mxu0 %v562
    %684 = vmatprep.subr.mxu0 0.0
    %685 = vmatpush1.msra.mxu0 %v563
    %686 = vmatprep.subr.mxu0 0.0
    %687 = vmatpush1.msra.mxu0 %v564
    %688 = vmatprep.subr.mxu0 0.0
    %689 = vmatpush1.msra.mxu0 %v565
    %690 = vmatprep.subr.mxu0 0.0
    %691 = vmatpush1.msra.mxu0 %v566
    %692 = vmatprep.subr.mxu0 0.0
    %693 = vmatpush1.msra.mxu0 %v567
    %694 = vmatprep.subr.mxu0 0.0
    %695 = vmatpush1.msra.mxu0 %v568
    %696 = vmatprep.subr.mxu0 0.0
    %697 = vmatpush1.msra.mxu0 %v569
    %698 = vmatprep.subr.mxu0 0.0
    %699 = vmatpush1.msra.mxu0 %v570
    %700 = vmatprep.subr.mxu0 0.0
    %701 = vmatpush1.msra.mxu0 %v571
    %702 = vmatprep.subr.mxu0 0.0
    %703 = vmatpush1.msra.mxu0 %v572
    %704 = vmatprep.subr.mxu0 0.0
    %705 = vmatpush1.msra.mxu0 %v573
    %706 = vmatprep.subr.mxu0 0.0
    %707 = vmatpush1.msra.mxu0 %v574
    %708 = vmatprep.subr.mxu0 0.0
    %709 = vmatpush1.msra.mxu0 %v575
    %710 = vmatprep.mubr.f32.mxu0 %v510
    %711 = vmatmul.mubr.f32.gmra.mrb[0].mxu0 %v495
    %v712 = vpop.f32.mrb[0].mxu0
    %v713 = vadd.f32 0.0, %v712
    %v714 = vpop.f32.mrb[0].mxu0
    %715 = vmatprep.mubr.f32.mxu0 %v511
    %716 = vmatmul.mubr.f32.gmra.mrb[0].mxu0 %v496
    %v717 = vpop.f32.mrb[0].mxu0
    %v718 = vadd.f32 0.0, %v717
    %v719 = vpop.f32.mrb[0].mxu0
    %720 = vmatprep.mubr.f32.mxu0 %v512
    %721 = vmatmul.mubr.f32.gmra.mrb[0].mxu0 %v497
    %v722 = vpop.f32.mrb[0].mxu0
    %v723 = vadd.f32 0.0, %v722
    %v724 = vpop.f32.mrb[0].mxu0
    %725 = vmatprep.mubr.f32.mxu0 %v513
    %726 = vmatmul.mubr.f32.gmra.mrb[0].mxu0 %v498
    %v727 = vpop.f32.mrb[0].mxu0
    %v728 = vadd.f32 0.0, %v727
    %v729 = vpop.f32.mrb[0].mxu0
    %730 = vmatprep.mubr.f32.mxu0 %v514
    %731 = vmatmul.mubr.f32.gmra.mrb[0].mxu0 %v499
    %v732 = vpop.f32.mrb[0].mxu0
    %v733 = vadd.f32 0.0, %v732
    %v734 = vpop.f32.mrb[0].mxu0
    %735 = vmatprep.mubr.f32.mxu0 %v515
    %736 = vmatmul.mubr.f32.gmra.mrb[0].mxu0 %v500
    %v737 = vpop.f32.mrb[0].mxu0
    %v738 = vadd.f32 0.0, %v737
    %v739 = vpop.f32.mrb[0].mxu0
    %740 = vmatprep.mubr.f32.mxu0 %v516
    %741 = vmatmul.mubr.f32.gmra.mrb[0].mxu0 %v501
    %v742 = vpop.f32.mrb[0].mxu0
    %v743 = vadd.f32 0.0, %v742
    %v744 = vpop.f32.mrb[0].mxu0
    %745 = vmatprep.mubr.f32.mxu0 %v517
    %746 = vmatmul.mubr.f32.gmra.mrb[0].mxu0 %v502
    %v747 = vpop.f32.mrb[0].mxu0
    %v748 = vadd.f32 0.0, %v747
    %v749 = vpop.f32.mrb[0].mxu0
    %750 = vmatprep.mubr.f32.mxu0 %v518
    %751 = vmatmul.mubr.f32.gmra.mrb[0].mxu0 %v495
    %v752 = vpop.f32.mrb[0].mxu0
    %v753 = vadd.f32 0.0, %v752
    %v754 = vpop.f32.mrb[0].mxu0
    %755 = vmatprep.mubr.f32.mxu0 %v519
    %756 = vmatmul.mubr.f32.gmra.mrb[0].mxu0 %v503
    %v757 = vpop.f32.mrb[0].mxu0
    %v758 = vadd.f32 0.0, %v757
    %v759 = vpop.f32.mrb[0].mxu0
    %760 = vmatprep.mubr.f32.mxu0 %v520
    %761 = vmatmul.mubr.f32.gmra.mrb[0].mxu0 %v504
    %v762 = vpop.f32.mrb[0].mxu0
    %v763 = vadd.f32 0.0, %v762
    %v764 = vpop.f32.mrb[0].mxu0
    %765 = vmatprep.mubr.f32.mxu0 %v521
    %766 = vmatmul.mubr.f32.gmra.mrb[0].mxu0 %v505
    %v767 = vpop.f32.mrb[0].mxu0
    %v768 = vadd.f32 0.0, %v767
    %v769 = vpop.f32.mrb[0].mxu0
    %770 = vmatprep.mubr.f32.mxu0 %v522
    %771 = vmatmul.mubr.f32.gmra.mrb[0].mxu0 %v506
    %v772 = vpop.f32.mrb[0].mxu0
    %v773 = vadd.f32 0.0, %v772
    %v774 = vpop.f32.mrb[0].mxu0
    %775 = vmatprep.mubr.f32.mxu0 %v523
    %776 = vmatmul.mubr.f32.gmra.mrb[0].mxu0 %v507
    %v777 = vpop.f32.mrb[0].mxu0
    %v778 = vadd.f32 0.0, %v777
    %v779 = vpop.f32.mrb[0].mxu0
    %780 = vmatprep.mubr.f32.mxu0 %v524
    %781 = vmatmul.mubr.f32.gmra.mrb[0].mxu0 %v508
    %v782 = vpop.f32.mrb[0].mxu0
    %v783 = vadd.f32 0.0, %v782
    %v784 = vpop.f32.mrb[0].mxu0
    %785 = vmatprep.mubr.f32.mxu0 %v525
    %786 = vmatmul.mubr.f32.gmra.mrb[0].mxu0 %v509
    %v787 = vpop.f32.mrb[0].mxu0
    %v788 = vadd.f32 0.0, %v787
    %v789 = vpop.f32.mrb[0].mxu0
    %790 = vdwg.mxu0
    %791 = vmatprep.subr.mxu0 0.0
    %792 = vmatpush1.msra.mxu0 %v576
    %793 = vmatprep.subr.mxu0 0.0
    %794 = vmatpush1.msra.mxu0 %v577
    %795 = vmatprep.subr.mxu0 0.0
    %796 = vmatpush1.msra.mxu0 %v578
    %797 = vmatprep.subr.mxu0 0.0
    %798 = vmatpush1.msra.mxu0 %v579
    %799 = vmatprep.subr.mxu0 0.0
    %800 = vmatpush1.msra.mxu0 %v580
    %801 = vmatprep.subr.mxu0 0.0
    %802 = vmatpush1.msra.mxu0 %v581
    %803 = vmatprep.subr.mxu0 0.0
    %804 = vmatpush1.msra.mxu0 %v582
    %805 = vmatprep.subr.mxu0 0.0
    %806 = vmatpush1.msra.mxu0 %v583
    %807 = vmatprep.subr.mxu0 0.0
    %808 = vmatpush1.msra.mxu0 %v584
    %809 = vmatprep.subr.mxu0 0.0
    %810 = vmatpush1.msra.mxu0 %v585
    %811 = vmatprep.subr.mxu0 0.0
    %812 = vmatpush1.msra.mxu0 %v586
    %813 = vmatprep.subr.mxu0 0.0
    %814 = vmatpush1.msra.mxu0 %v587
    %815 = vmatprep.subr.mxu0 0.0
    %816 = vmatpush1.msra.mxu0 %v588
    %817 = vmatprep.subr.mxu0 0.0
    %818 = vmatpush1.msra.mxu0 %v589
    %819 = vmatprep.subr.mxu0 0.0
    %820 = vmatpush1.msra.mxu0 %v590
    %821 = vmatprep.subr.mxu0 0.0
    %822 = vmatpush1.msra.mxu0 %v591
    %823 = vmatprep.subr.mxu0 0.0
    %824 = vmatpush1.msra.mxu0 %v592
    %825 = vmatprep.subr.mxu0 0.0
    %826 = vmatpush1.msra.mxu0 %v593
    %827 = vmatprep.subr.mxu0 0.0
    %828 = vmatpush1.msra.mxu0 %v594
    %829 = vmatprep.subr.mxu0 0.0
    %830 = vmatpush1.msra.mxu0 %v595
    %831 = vmatprep.subr.mxu0 0.0
    %832 = vmatpush1.msra.mxu0 %v596
    %833 = vmatprep.subr.mxu0 0.0
    %834 = vmatpush1.msra.mxu0 %v597
    %835 = vmatprep.subr.mxu0 0.0
    %836 = vmatpush1.msra.mxu0 %v598
    %837 = vmatprep.subr.mxu0 0.0
    %838 = vmatpush1.msra.mxu0 %v599
    %839 = vmatprep.subr.mxu0 0.0
    %840 = vmatpush1.msra.mxu0 %v600
    %841 = vmatprep.subr.mxu0 0.0
    %842 = vmatpush1.msra.mxu0 %v601
    %843 = vmatprep.subr.mxu0 0.0
    %844 = vmatpush1.msra.mxu0 %v602
    %845 = vmatprep.subr.mxu0 0.0
    %846 = vmatpush1.msra.mxu0 %v603
    %847 = vmatprep.subr.mxu0 0.0
    %848 = vmatpush1.msra.mxu0 %v604
    %849 = vmatprep.subr.mxu0 0.0
    %850 = vmatpush1.msra.mxu0 %v605
    %851 = vmatprep.subr.mxu0 0.0
    %852 = vmatpush1.msra.mxu0 %v606
    %853 = vmatprep.subr.mxu0 0.0
    %854 = vmatpush1.msra.mxu0 %v607
    %855 = vmatprep.mubr.f32.mxu0 %v497
    %856 = vmatmul.mubr.f32.gmra.mrb[0].mxu0 %v526
    %v857 = vpop.f32.mrb[0].mxu0
    %v858 = vadd.f32 %v713, %v857
    %v859 = vpop.f32.mrb[0].mxu0
    %860 = vmatprep.mubr.f32.mxu0 %v498
    %861 = vmatmul.mubr.f32.gmra.mrb[0].mxu0 %v527
    %v862 = vpop.f32.mrb[0].mxu0
    %v863 = vadd.f32 %v718, %v862
    %v864 = vpop.f32.mrb[0].mxu0
    %865 = vmatprep.mubr.f32.mxu0 %v499
    %866 = vmatmul.mubr.f32.gmra.mrb[0].mxu0 %v528
    %v867 = vpop.f32.mrb[0].mxu0
    %v868 = vadd.f32 %v723, %v867
    %v869 = vpop.f32.mrb[0].mxu0
    %870 = vmatprep.mubr.f32.mxu0 %v500
    %871 = vmatmul.mubr.f32.gmra.mrb[0].mxu0 %v529
    %v872 = vpop.f32.mrb[0].mxu0
    %v873 = vadd.f32 %v728, %v872
    %v874 = vpop.f32.mrb[0].mxu0
    %875 = vmatprep.mubr.f32.mxu0 %v501
    %876 = vmatmul.mubr.f32.gmra.mrb[0].mxu0 %v530
    %v877 = vpop.f32.mrb[0].mxu0
    %v878 = vadd.f32 %v733, %v877
    %v879 = vpop.f32.mrb[0].mxu0
    %880 = vmatprep.mubr.f32.mxu0 %v502
    %881 = vmatmul.mubr.f32.gmra.mrb[0].mxu0 %v531
    %v882 = vpop.f32.mrb[0].mxu0
    %v883 = vadd.f32 %v738, %v882
    %v884 = vpop.f32.mrb[0].mxu0
    %885 = vmatprep.mubr.f32.mxu0 %v542
    %886 = vmatmul.mubr.f32.gmra.mrb[0].mxu0 %v532
    %v887 = vpop.f32.mrb[0].mxu0
    %v888 = vadd.f32 %v743, %v887
    %v889 = vpop.f32.mrb[0].mxu0
    %890 = vmatprep.mubr.f32.mxu0 %v495
    %891 = vmatmul.mubr.f32.gmra.mrb[0].mxu0 %v533
    %v892 = vpop.f32.mrb[0].mxu0
    %v893 = vadd.f32 %v748, %v892
    %v894 = vpop.f32.mrb[0].mxu0
    %895 = vmatprep.mubr.f32.mxu0 %v504
    %896 = vmatmul.mubr.f32.gmra.mrb[0].mxu0 %v534
    %v897 = vpop.f32.mrb[0].mxu0
    %v898 = vadd.f32 %v753, %v897
    %v899 = vpop.f32.mrb[0].mxu0
    %900 = vmatprep.mubr.f32.mxu0 %v505
    %901 = vmatmul.mubr.f32.gmra.mrb[0].mxu0 %v535
    %v902 = vpop.f32.mrb[0].mxu0
    %v903 = vadd.f32 %v758, %v902
    %v904 = vpop.f32.mrb[0].mxu0
    %905 = vmatprep.mubr.f32.mxu0 %v506
    %906 = vmatmul.mubr.f32.gmra.mrb[0].mxu0 %v536
    %v907 = vpop.f32.mrb[0].mxu0
    %v908 = vadd.f32 %v763, %v907
    %v909 = vpop.f32.mrb[0].mxu0
    %910 = vmatprep.mubr.f32.mxu0 %v507
    %911 = vmatmul.mubr.f32.gmra.mrb[0].mxu0 %v537
    %v912 = vpop.f32.mrb[0].mxu0
    %v913 = vadd.f32 %v768, %v912
    %v914 = vpop.f32.mrb[0].mxu0
    %915 = vmatprep.mubr.f32.mxu0 %v508
    %916 = vmatmul.mubr.f32.gmra.mrb[0].mxu0 %v538
    %v917 = vpop.f32.mrb[0].mxu0
    %v918 = vadd.f32 %v773, %v917
    %v919 = vpop.f32.mrb[0].mxu0
    %920 = vmatprep.mubr.f32.mxu0 %v509
    %921 = vmatmul.mubr.f32.gmra.mrb[0].mxu0 %v539
    %v922 = vpop.f32.mrb[0].mxu0
    %v923 = vadd.f32 %v778, %v922
    %v924 = vpop.f32.mrb[0].mxu0
    %925 = vmatprep.mubr.f32.mxu0 %v543
    %926 = vmatmul.mubr.f32.gmra.mrb[0].mxu0 %v540
    %v927 = vpop.f32.mrb[0].mxu0
    %v928 = vadd.f32 %v783, %v927
    %v929 = vpop.f32.mrb[0].mxu0
    %930 = vmatprep.mubr.f32.mxu0 %v495
    %931 = vmatmul.mubr.f32.gmra.mrb[0].mxu0 %v541
    %v932 = vpop.f32.mrb[0].mxu0
    %v933 = vadd.f32 %v788, %v932
    %v934 = vpop.f32.mrb[0].mxu0
    %935 = vdwg.mxu0
    %936 = vmatprep.subr.mxu0 0.0
    %937 = vmatpush1.msra.mxu0 %v608
    %938 = vmatprep.subr.mxu0 0.0
    %939 = vmatpush1.msra.mxu0 %v609
    %940 = vmatprep.subr.mxu0 0.0
    %941 = vmatpush1.msra.mxu0 %v610
    %942 = vmatprep.subr.mxu0 0.0
    %943 = vmatpush1.msra.mxu0 %v611
    %944 = vmatprep.subr.mxu0 0.0
    %945 = vmatpush1.msra.mxu0 %v612
    %946 = vmatprep.subr.mxu0 0.0
    %947 = vmatpush1.msra.mxu0 %v613
    %948 = vmatprep.subr.mxu0 0.0
    %949 = vmatpush1.msra.mxu0 %v614
    %950 = vmatprep.subr.mxu0 0.0
    %951 = vmatpush1.msra.mxu0 %v615
    %952 = vmatprep.subr.mxu0 0.0
    %953 = vmatpush1.msra.mxu0 0.0
    %954 = vmatprep.subr.mxu0 0.0
    %955 = vmatpush1.msra.mxu0 0.0
    %956 = vmatprep.subr.mxu0 0.0
    %957 = vmatpush1.msra.mxu0 0.0
    %958 = vmatprep.subr.mxu0 0.0
    %959 = vmatpush1.msra.mxu0 0.0
    %960 = vmatprep.subr.mxu0 0.0
    %961 = vmatpush1.msra.mxu0 0.0
    %962 = vmatprep.subr.mxu0 0.0
    %963 = vmatpush1.msra.mxu0 0.0
    %964 = vmatprep.subr.mxu0 0.0
    %965 = vmatpush1.msra.mxu0 0.0
    %966 = vmatprep.subr.mxu0 0.0
    %967 = vmatpush1.msra.mxu0 0.0
    %968 = vmatprep.subr.mxu0 0.0
    %969 = vmatpush1.msra.mxu0 0.0
    %970 = vmatprep.subr.mxu0 0.0
    %971 = vmatpush1.msra.mxu0 0.0
    %972 = vmatprep.subr.mxu0 0.0
    %973 = vmatpush1.msra.mxu0 0.0
    %974 = vmatprep.subr.mxu0 0.0
    %975 = vmatpush1.msra.mxu0 0.0
    %976 = vmatprep.subr.mxu0 0.0
    %977 = vmatpush1.msra.mxu0 0.0
    %978 = vmatprep.subr.mxu0 0.0
    %979 = vmatpush1.msra.mxu0 0.0
    %980 = vmatprep.subr.mxu0 0.0
    %981 = vmatpush1.msra.mxu0 0.0
    %982 = vmatprep.subr.mxu0 0.0
    %983 = vmatpush1.msra.mxu0 0.0
    %984 = vmatprep.subr.mxu0 0.0
    %985 = vmatpush1.msra.mxu0 0.0
    %986 = vmatprep.subr.mxu0 0.0
    %987 = vmatpush1.msra.mxu0 0.0
    %988 = vmatprep.subr.mxu0 0.0
    %989 = vmatpush1.msra.mxu0 0.0
    %990 = vmatprep.subr.mxu0 0.0
    %991 = vmatpush1.msra.mxu0 0.0
    %992 = vmatprep.subr.mxu0 0.0
    %993 = vmatpush1.msra.mxu0 0.0
    %994 = vmatprep.subr.mxu0 0.0
    %995 = vmatpush1.msra.mxu0 0.0
    %996 = vmatprep.subr.mxu0 0.0
    %997 = vmatpush1.msra.mxu0 0.0
    %998 = vmatprep.subr.mxu0 0.0
    %999 = vmatpush1.msra.mxu0 0.0
    %1000 = vmatprep.mubr.f32.mxu0 0.0
    %1001 = vmatmul.mubr.f32.gmra.mrb[0].mxu0 %v616
    %v1002 = vpop.f32.mrb[0].mxu0
    %v1003 = vadd.f32 %v858, %v1002
    %v1004 = vpop.f32.mrb[0].mxu0
    %1005 = vmatprep.mubr.f32.mxu0 0.0
    %1006 = vmatmul.mubr.f32.gmra.mrb[0].mxu0 %v618
    %v1007 = vpop.f32.mrb[0].mxu0
    %v1008 = vadd.f32 %v863, %v1007
    %v1009 = vpop.f32.mrb[0].mxu0
    %1010 = vmatprep.mubr.f32.mxu0 0.0
    %1011 = vmatmul.mubr.f32.gmra.mrb[0].mxu0 %v620
    %v1012 = vpop.f32.mrb[0].mxu0
    %v1013 = vadd.f32 %v868, %v1012
    %v1014 = vpop.f32.mrb[0].mxu0
    %1015 = vmatprep.mubr.f32.mxu0 0.0
    %1016 = vmatmul.mubr.f32.gmra.mrb[0].mxu0 %v622
    %v1017 = vpop.f32.mrb[0].mxu0
    %v1018 = vadd.f32 %v873, %v1017
    %v1019 = vpop.f32.mrb[0].mxu0
    %1020 = vmatprep.mubr.f32.mxu0 0.0
    %1021 = vmatmul.mubr.f32.gmra.mrb[0].mxu0 %v624
    %v1022 = vpop.f32.mrb[0].mxu0
    %v1023 = vadd.f32 %v878, %v1022
    %v1024 = vpop.f32.mrb[0].mxu0
    %1025 = vmatprep.mubr.f32.mxu0 0.0
    %1026 = vmatmul.mubr.f32.gmra.mrb[0].mxu0 %v626
    %v1027 = vpop.f32.mrb[0].mxu0
    %v1028 = vadd.f32 %v883, %v1027
    %v1029 = vpop.f32.mrb[0].mxu0
    %1030 = vmatprep.mubr.f32.mxu0 0.0
    %1031 = vmatmul.mubr.f32.gmra.mrb[0].mxu0 %v628
    %v1032 = vpop.f32.mrb[0].mxu0
    %v1033 = vadd.f32 %v888, %v1032
    %v1034 = vpop.f32.mrb[0].mxu0
    %1035 = vmatprep.mubr.f32.mxu0 0.0
    %1036 = vmatmul.mubr.f32.gmra.mrb[0].mxu0 %v630
    %v1037 = vpop.f32.mrb[0].mxu0
    %v1038 = vadd.f32 %v893, %v1037
    %v1039 = vpop.f32.mrb[0].mxu0
    %1040 = vmatprep.mubr.f32.mxu0 0.0
    %1041 = vmatmul.mubr.f32.gmra.mrb[0].mxu0 %v632
    %v1042 = vpop.f32.mrb[0].mxu0
    %v1043 = vadd.f32 %v898, %v1042
    %v1044 = vpop.f32.mrb[0].mxu0
    %1045 = vmatprep.mubr.f32.mxu0 0.0
    %1046 = vmatmul.mubr.f32.gmra.mrb[0].mxu0 %v634
    %v1047 = vpop.f32.mrb[0].mxu0
    %v1048 = vadd.f32 %v903, %v1047
    %v1049 = vpop.f32.mrb[0].mxu0
    %1050 = vmatprep.mubr.f32.mxu0 0.0
    %1051 = vmatmul.mubr.f32.gmra.mrb[0].mxu0 %v636
    %v1052 = vpop.f32.mrb[0].mxu0
    %v1053 = vadd.f32 %v908, %v1052
    %v1054 = vpop.f32.mrb[0].mxu0
    %1055 = vmatprep.mubr.f32.mxu0 0.0
    %1056 = vmatmul.mubr.f32.gmra.mrb[0].mxu0 %v638
    %v1057 = vpop.f32.mrb[0].mxu0
    %v1058 = vadd.f32 %v913, %v1057
    %v1059 = vpop.f32.mrb[0].mxu0
    %1060 = vmatprep.mubr.f32.mxu0 0.0
    %1061 = vmatmul.mubr.f32.gmra.mrb[0].mxu0 %v640
    %v1062 = vpop.f32.mrb[0].mxu0
    %v1063 = vadd.f32 %v918, %v1062
    %v1064 = vpop.f32.mrb[0].mxu0
    %1065 = vmatprep.mubr.f32.mxu0 0.0
    %1066 = vmatmul.mubr.f32.gmra.mrb[0].mxu0 %v642
    %v1067 = vpop.f32.mrb[0].mxu0
    %v1068 = vadd.f32 %v923, %v1067
    %v1069 = vpop.f32.mrb[0].mxu0
    %1070 = vmatprep.mubr.f32.mxu0 0.0
    %1071 = vmatmul.mubr.f32.gmra.mrb[0].mxu0 %v644
    %v1072 = vpop.f32.mrb[0].mxu0
    %v1073 = vadd.f32 %v928, %v1072
    %v1074 = vpop.f32.mrb[0].mxu0
    %1075 = vmatprep.mubr.f32.mxu0 0.0
    %1076 = vmatmul.mubr.f32.gmra.mrb[0].mxu0 %v630
    %v1077 = vpop.f32.mrb[0].mxu0
    %v1078 = vadd.f32 %v933, %v1077
    %v1079 = vpop.f32.mrb[0].mxu0
    %1080 = vdwg.mxu0
    %v1081 = vld [vmem:[%s2] sm:$0x1]
    %v1082 = vld [vmem:[%s3] sm:$0x1]
    %v1083 = vsel %vm494, %v1003, 0.0
    %v1084 = vsel %vm494, %v1008, 0.0
    %v1085 = vadd.f32 %v1083, %v1084
    %v1086 = vsel %vm494, %v1013, 0.0
    %v1087 = vadd.f32 %v1085, %v1086
    %v1088 = vsel %vm494, %v1018, 0.0
    %v1089 = vadd.f32 %v1087, %v1088
    %v1090 = vsel %vm494, %v1023, 0.0
    %v1091 = vadd.f32 %v1089, %v1090
    %v1092 = vsel %vm494, %v1028, 0.0
    %v1093 = vadd.f32 %v1091, %v1092
    %v1094 = vsel %vm494, %v1033, 0.0
    %v1095 = vadd.f32 %v1093, %v1094
    %v1096 = vsel %vm494, %v1038, 0.0
    %v1097 = vadd.f32 %v1095, %v1096
    %v1098 = vsel %vm494, %v1043, 0.0
    %v1099 = vadd.f32 %v1097, %v1098
    %v1100 = vsel %vm494, %v1048, 0.0
    %v1101 = vadd.f32 %v1099, %v1100
    %v1102 = vsel %vm494, %v1053, 0.0
    %v1103 = vadd.f32 %v1101, %v1102
    %v1104 = vsel %vm494, %v1058, 0.0
    %v1105 = vadd.f32 %v1103, %v1104
    %v1106 = vsel %vm494, %v1063, 0.0
    %v1107 = vadd.f32 %v1105, %v1106
    %v1108 = vsel %vm494, %v1068, 0.0
    %v1109 = vadd.f32 %v1107, %v1108
    %v1110 = vsel %vm494, %v1073, 0.0
    %v1111 = vadd.f32 %v1109, %v1110
    %v1112 = vsel %vm494, %v1078, 0.0
    %v1113 = vadd.f32 %v1111, %v1112
    %v1114 = vrot.slane %v1113, 4
    %v1115 = vadd.f32 %v1113, %v1114
    %v1116 = vrot.slane %v1115, 2
    %v1117 = vadd.f32 %v1115, %v1116
    %v1118 = vrot.slane %v1117, 1
    %v1119 = vadd.f32 %v1117, %v1118
    %v1120 = vrcp.pop 128.0
    %v1121 = vmul.f32 %v1119, %v1120
    %v1122 = vsub.f32 %v1003, %v1121
    %v1123 = vsub.f32 %v1008, %v1121
    %v1124 = vsub.f32 %v1013, %v1121
    %v1125 = vsub.f32 %v1018, %v1121
    %v1126 = vsub.f32 %v1023, %v1121
    %v1127 = vsub.f32 %v1028, %v1121
    %v1128 = vsub.f32 %v1033, %v1121
    %v1129 = vsub.f32 %v1038, %v1121
    %v1130 = vsub.f32 %v1043, %v1121
    %v1131 = vsub.f32 %v1048, %v1121
    %v1132 = vsub.f32 %v1053, %v1121
    %v1133 = vsub.f32 %v1058, %v1121
    %v1134 = vsub.f32 %v1063, %v1121
    %v1135 = vsub.f32 %v1068, %v1121
    %v1136 = vsub.f32 %v1073, %v1121
    %v1137 = vsub.f32 %v1078, %v1121
    %v1138 = vmul.f32 %v1122, %v1122
    %v1139 = vmul.f32 %v1123, %v1123
    %v1140 = vmul.f32 %v1124, %v1124
    %v1141 = vmul.f32 %v1125, %v1125
    %v1142 = vmul.f32 %v1126, %v1126
    %v1143 = vmul.f32 %v1127, %v1127
    %v1144 = vmul.f32 %v1128, %v1128
    %v1145 = vmul.f32 %v1129, %v1129
    %v1146 = vmul.f32 %v1130, %v1130
    %v1147 = vmul.f32 %v1131, %v1131
    %v1148 = vmul.f32 %v1132, %v1132
    %v1149 = vmul.f32 %v1133, %v1133
    %v1150 = vmul.f32 %v1134, %v1134
    %v1151 = vmul.f32 %v1135, %v1135
    %v1152 = vmul.f32 %v1136, %v1136
    %v1153 = vmul.f32 %v1137, %v1137
    %v1154 = vsel %vm494, %v1138, 0.0
    %v1155 = vsel %vm494, %v1139, 0.0
    %v1156 = vadd.f32 %v1154, %v1155
    %v1157 = vsel %vm494, %v1140, 0.0
    %v1158 = vadd.f32 %v1156, %v1157
    %v1159 = vsel %vm494, %v1141, 0.0
    %v1160 = vadd.f32 %v1158, %v1159
    %v1161 = vsel %vm494, %v1142, 0.0
    %v1162 = vadd.f32 %v1160, %v1161
    %v1163 = vsel %vm494, %v1143, 0.0
    %v1164 = vadd.f32 %v1162, %v1163
    %v1165 = vsel %vm494, %v1144, 0.0
    %v1166 = vadd.f32 %v1164, %v1165
    %v1167 = vsel %vm494, %v1145, 0.0
    %v1168 = vadd.f32 %v1166, %v1167
    %v1169 = vsel %vm494, %v1146, 0.0
    %v1170 = vadd.f32 %v1168, %v1169
    %v1171 = vsel %vm494, %v1147, 0.0
    %v1172 = vadd.f32 %v1170, %v1171
    %v1173 = vsel %vm494, %v1148, 0.0
    %v1174 = vadd.f32 %v1172, %v1173
    %v1175 = vsel %vm494, %v1149, 0.0
    %v1176 = vadd.f32 %v1174, %v1175
    %v1177 = vsel %vm494, %v1150, 0.0
    %v1178 = vadd.f32 %v1176, %v1177
    %v1179 = vsel %vm494, %v1151, 0.0
    %v1180 = vadd.f32 %v1178, %v1179
    %v1181 = vsel %vm494, %v1152, 0.0
    %v1182 = vadd.f32 %v1180, %v1181
    %v1183 = vsel %vm494, %v1153, 0.0
    %v1184 = vadd.f32 %v1182, %v1183
    %v1185 = vrot.slane %v1184, 4
    %v1186 = vadd.f32 %v1184, %v1185
    %v1187 = vrot.slane %v1186, 2
    %v1188 = vadd.f32 %v1186, %v1187
    %v1189 = vrot.slane %v1188, 1
    %v1190 = vadd.f32 %v1188, %v1189
    %v1191 = vmul.f32 %v1190, %v1120
    %v1192 = vadd.f32 %v1191, 1e-05
    %v1193 = vrsqrt.pop %v1192
    %v1194 = vmul.f32 %v1081, %v1193
    %v1195 = vmul.f32 %v1121, %v1194
    %v1196 = vsub.f32 %v1082, %v1195
    %v1198 = vlaneseq
    %v1199 = vshrl.u32 %v1198, 7
    %v1200 = vsub.s32 0, %v1199
    %v1201 = vrot.slane %v1194, %v1200
    %v1203 = vmul.f32 %v1003, %v1201
    %v1204 = vmul.f32 %v1008, %v1201
    %v1205 = vmul.f32 %v1013, %v1201
    %v1206 = vmul.f32 %v1018, %v1201
    %v1207 = vmul.f32 %v1023, %v1201
    %v1208 = vmul.f32 %v1028, %v1201
    %v1209 = vmul.f32 %v1033, %v1201
    %v1210 = vmul.f32 %v1038, %v1201
    %v1211 = vmul.f32 %v1043, %v1201
    %v1212 = vmul.f32 %v1048, %v1201
    %v1213 = vmul.f32 %v1053, %v1201
    %v1214 = vmul.f32 %v1058, %v1201
    %v1215 = vmul.f32 %v1063, %v1201
    %v1216 = vmul.f32 %v1068, %v1201
    %v1217 = vmul.f32 %v1073, %v1201
    %v1218 = vmul.f32 %v1078, %v1201
    %v1220 = vlaneseq
    %v1221 = vshrl.u32 %v1220, 7
    %v1222 = vsub.s32 0, %v1221
    %v1223 = vrot.slane %v1196, %v1222
    %v1225 = vadd.f32 %v1203, %v1223
    %v1226 = vadd.f32 %v1204, %v1223
    %v1227 = vadd.f32 %v1205, %v1223
    %v1228 = vadd.f32 %v1206, %v1223
    %v1229 = vadd.f32 %v1207, %v1223
    %v1230 = vadd.f32 %v1208, %v1223
    %v1231 = vadd.f32 %v1209, %v1223
    %v1232 = vadd.f32 %v1210, %v1223
    %v1233 = vadd.f32 %v1211, %v1223
    %v1234 = vadd.f32 %v1212, %v1223
    %v1235 = vadd.f32 %v1213, %v1223
    %v1236 = vadd.f32 %v1214, %v1223
    %v1237 = vadd.f32 %v1215, %v1223
    %v1238 = vadd.f32 %v1216, %v1223
    %v1239 = vadd.f32 %v1217, %v1223
    %v1240 = vadd.f32 %v1218, %v1223
    %v1241 = vmax.f32 %v1225, 0.0
    %v1242 = vmax.f32 %v1226, 0.0
    %v1243 = vmax.f32 %v1227, 0.0
    %v1244 = vmax.f32 %v1228, 0.0
    %v1245 = vmax.f32 %v1229, 0.0
    %v1246 = vmax.f32 %v1230, 0.0
    %v1247 = vmax.f32 %v1231, 0.0
    %v1248 = vmax.f32 %v1232, 0.0
    %v1249 = vmax.f32 %v1233, 0.0
    %v1250 = vmax.f32 %v1234, 0.0
    %v1251 = vmax.f32 %v1235, 0.0
    %v1252 = vmax.f32 %v1236, 0.0
    %v1253 = vmax.f32 %v1237, 0.0
    %v1254 = vmax.f32 %v1238, 0.0
    %v1255 = vmax.f32 %v1239, 0.0
    %v1256 = vmax.f32 %v1240, 0.0
    %v1273 = vrot.slane %v1241, 7
    %v1274 = vrot.slane %v1242, 7
    %v1275 = vrot.slane %v1243, 7
    %v1276 = vrot.slane %v1244, 7
    %v1277 = vrot.slane %v1245, 7
    %v1278 = vrot.slane %v1246, 7
    %v1279 = vrot.slane %v1247, 7
    %v1280 = vrot.slane %v1248, 7
    %v1281 = vrot.slane %v1249, 7
    %v1282 = vrot.slane %v1250, 7
    %v1283 = vrot.slane %v1251, 7
    %v1284 = vrot.slane %v1252, 7
    %v1285 = vrot.slane %v1253, 7
    %v1286 = vrot.slane %v1254, 7
    %v1287 = vrot.slane %v1255, 7
    %v1288 = vrot.slane %v1256, 7
    %v1305 = vsel %vm148, 0.0, %v1273
    %v1306 = vsel %vm148, 0.0, %v1274
    %v1307 = vsel %vm148, 0.0, %v1275
    %v1308 = vsel %vm148, 0.0, %v1276
    %v1309 = vsel %vm148, 0.0, %v1277
    %v1310 = vsel %vm148, 0.0, %v1278
    %v1311 = vsel %vm148, 0.0, %v1279
    %v1312 = vsel %vm148, 0.0, %v1280
    %v1313 = vsel %vm148, 0.0, %v1281
    %v1314 = vsel %vm148, 0.0, %v1282
    %v1315 = vsel %vm148, 0.0, %v1283
    %v1316 = vsel %vm148, 0.0, %v1284
    %v1317 = vsel %vm148, 0.0, %v1285
    %v1318 = vsel %vm148, 0.0, %v1286
    %v1319 = vsel %vm148, 0.0, %v1287
    %v1320 = vsel %vm148, 0.0, %v1288
    %v1321 = vsel %vm148, %v1273, 0.0
    %v1322 = vsel %vm148, %v1274, 0.0
    %v1323 = vsel %vm148, %v1275, 0.0
    %v1324 = vsel %vm148, %v1276, 0.0
    %v1325 = vsel %vm148, %v1277, 0.0
    %v1326 = vsel %vm148, %v1278, 0.0
    %v1327 = vsel %vm148, %v1279, 0.0
    %v1328 = vsel %vm148, %v1280, 0.0
    %v1329 = vsel %vm148, %v1281, 0.0
    %v1330 = vsel %vm148, %v1282, 0.0
    %v1331 = vsel %vm148, %v1283, 0.0
    %v1332 = vsel %vm148, %v1284, 0.0
    %v1333 = vsel %vm148, %v1285, 0.0
    %v1334 = vsel %vm148, %v1286, 0.0
    %v1335 = vsel %vm148, %v1287, 0.0
    %v1336 = vsel %vm148, %v1288, 0.0
    %v1365 = vrot.slane %v1305, 1
    %v1366 = vrot.slane %v1321, 1
    %v1367 = vsel %vm210, %v1365, %v1366
    %v1368 = vrot.slane %v1306, 1
    %v1369 = vrot.slane %v1322, 1
    %v1370 = vsel %vm210, %v1368, %v1369
    %v1371 = vrot.slane %v1307, 1
    %v1372 = vrot.slane %v1323, 1
    %v1373 = vsel %vm210, %v1371, %v1372
    %v1374 = vrot.slane %v1308, 1
    %v1375 = vrot.slane %v1324, 1
    %v1376 = vsel %vm210, %v1374, %v1375
    %v1377 = vrot.slane %v1309, 1
    %v1378 = vrot.slane %v1325, 1
    %v1379 = vsel %vm210, %v1377, %v1378
    %v1380 = vrot.slane %v1310, 1
    %v1381 = vrot.slane %v1326, 1
    %v1382 = vsel %vm210, %v1380, %v1381
    %v1383 = vrot.slane %v1311, 1
    %v1384 = vrot.slane %v1327, 1
    %v1385 = vsel %vm210, %v1383, %v1384
    %v1386 = vrot.slane %v1313, 1
    %v1387 = vrot.slane %v1329, 1
    %v1388 = vsel %vm210, %v1386, %v1387
    %v1389 = vrot.slane %v1314, 1
    %v1390 = vrot.slane %v1330, 1
    %v1391 = vsel %vm210, %v1389, %v1390
    %v1392 = vrot.slane %v1315, 1
    %v1393 = vrot.slane %v1331, 1
    %v1394 = vsel %vm210, %v1392, %v1393
    %v1395 = vrot.slane %v1316, 1
    %v1396 = vrot.slane %v1332, 1
    %v1397 = vsel %vm210, %v1395, %v1396
    %v1398 = vrot.slane %v1317, 1
    %v1399 = vrot.slane %v1333, 1
    %v1400 = vsel %vm210, %v1398, %v1399
    %v1401 = vrot.slane %v1318, 1
    %v1402 = vrot.slane %v1334, 1
    %v1403 = vsel %vm210, %v1401, %v1402
    %v1404 = vrot.slane %v1319, 1
    %v1405 = vrot.slane %v1335, 1
    %v1406 = vsel %vm210, %v1404, %v1405
    %1407 = vrot.lane.b32.xlu0 %v1367, 64
    %v1408 = vpop.permute.xlu0 %1407
    %1409 = vrot.lane.b32.xlu0 %v1370, 64
    %v1410 = vpop.permute.xlu0 %1409
    %1411 = vrot.lane.b32.xlu0 %v1373, 64
    %v1412 = vpop.permute.xlu0 %1411
    %1413 = vrot.lane.b32.xlu0 %v1376, 64
    %v1414 = vpop.permute.xlu0 %1413
    %1415 = vrot.lane.b32.xlu0 %v1379, 64
    %v1416 = vpop.permute.xlu0 %1415
    %1417 = vrot.lane.b32.xlu0 %v1382, 64
    %v1418 = vpop.permute.xlu0 %1417
    %1419 = vrot.lane.b32.xlu0 %v1385, 64
    %v1420 = vpop.permute.xlu0 %1419
    %1421 = vrot.lane.b32.xlu0 %v1388, 64
    %v1422 = vpop.permute.xlu0 %1421
    %1423 = vrot.lane.b32.xlu0 %v1391, 64
    %v1424 = vpop.permute.xlu0 %1423
    %1425 = vrot.lane.b32.xlu0 %v1394, 64
    %v1426 = vpop.permute.xlu0 %1425
    %1427 = vrot.lane.b32.xlu0 %v1397, 64
    %v1428 = vpop.permute.xlu0 %1427
    %1429 = vrot.lane.b32.xlu0 %v1400, 64
    %v1430 = vpop.permute.xlu0 %1429
    %1431 = vrot.lane.b32.xlu0 %v1403, 64
    %v1432 = vpop.permute.xlu0 %1431
    %1433 = vrot.lane.b32.xlu0 %v1406, 64
    %v1434 = vpop.permute.xlu0 %1433
    %v1449 = vrot.slane %v1305, 2
    %v1450 = vrot.slane %v1321, 2
    %v1451 = vsel %vm300, %v1449, %v1450
    %v1452 = vrot.slane %v1306, 2
    %v1453 = vrot.slane %v1322, 2
    %v1454 = vsel %vm300, %v1452, %v1453
    %v1455 = vrot.slane %v1307, 2
    %v1456 = vrot.slane %v1323, 2
    %v1457 = vsel %vm300, %v1455, %v1456
    %v1458 = vrot.slane %v1308, 2
    %v1459 = vrot.slane %v1324, 2
    %v1460 = vsel %vm300, %v1458, %v1459
    %v1461 = vrot.slane %v1309, 2
    %v1462 = vrot.slane %v1325, 2
    %v1463 = vsel %vm300, %v1461, %v1462
    %v1464 = vrot.slane %v1310, 2
    %v1465 = vrot.slane %v1326, 2
    %v1466 = vsel %vm300, %v1464, %v1465
    %v1467 = vrot.slane %v1311, 2
    %v1468 = vrot.slane %v1327, 2
    %v1469 = vsel %vm300, %v1467, %v1468
    %v1470 = vrot.slane %v1313, 2
    %v1471 = vrot.slane %v1329, 2
    %v1472 = vsel %vm300, %v1470, %v1471
    %v1473 = vrot.slane %v1314, 2
    %v1474 = vrot.slane %v1330, 2
    %v1475 = vsel %vm300, %v1473, %v1474
    %v1476 = vrot.slane %v1315, 2
    %v1477 = vrot.slane %v1331, 2
    %v1478 = vsel %vm300, %v1476, %v1477
    %v1479 = vrot.slane %v1316, 2
    %v1480 = vrot.slane %v1332, 2
    %v1481 = vsel %vm300, %v1479, %v1480
    %v1482 = vrot.slane %v1317, 2
    %v1483 = vrot.slane %v1333, 2
    %v1484 = vsel %vm300, %v1482, %v1483
    %v1485 = vrot.slane %v1318, 2
    %v1486 = vrot.slane %v1334, 2
    %v1487 = vsel %vm300, %v1485, %v1486
    %v1488 = vrot.slane %v1319, 2
    %v1489 = vrot.slane %v1335, 2
    %v1490 = vsel %vm300, %v1488, %v1489
    %1507 = vrot.lane.b32.xlu0 %v1305, 64
    %v1508 = vpop.permute.xlu0 %1507
    %1509 = vrot.lane.b32.xlu0 %v1306, 64
    %v1510 = vpop.permute.xlu0 %1509
    %1511 = vrot.lane.b32.xlu0 %v1307, 64
    %v1512 = vpop.permute.xlu0 %1511
    %1513 = vrot.lane.b32.xlu0 %v1308, 64
    %v1514 = vpop.permute.xlu0 %1513
    %1515 = vrot.lane.b32.xlu0 %v1309, 64
    %v1516 = vpop.permute.xlu0 %1515
    %1517 = vrot.lane.b32.xlu0 %v1310, 64
    %v1518 = vpop.permute.xlu0 %1517
    %1519 = vrot.lane.b32.xlu0 %v1311, 64
    %v1520 = vpop.permute.xlu0 %1519
    %1521 = vrot.lane.b32.xlu0 %v1312, 64
    %v1522 = vpop.permute.xlu0 %1521
    %1523 = vrot.lane.b32.xlu0 %v1313, 64
    %v1524 = vpop.permute.xlu0 %1523
    %1525 = vrot.lane.b32.xlu0 %v1314, 64
    %v1526 = vpop.permute.xlu0 %1525
    %1527 = vrot.lane.b32.xlu0 %v1315, 64
    %v1528 = vpop.permute.xlu0 %1527
    %1529 = vrot.lane.b32.xlu0 %v1316, 64
    %v1530 = vpop.permute.xlu0 %1529
    %1531 = vrot.lane.b32.xlu0 %v1317, 64
    %v1532 = vpop.permute.xlu0 %1531
    %1533 = vrot.lane.b32.xlu0 %v1318, 64
    %v1534 = vpop.permute.xlu0 %1533
    %1535 = vrot.lane.b32.xlu0 %v1319, 64
    %v1536 = vpop.permute.xlu0 %1535
    %1537 = vrot.lane.b32.xlu0 %v1320, 64
    %v1538 = vpop.permute.xlu0 %1537
    %v1557 = vrot.slane %v1312, 1
    %v1558 = vrot.slane %v1328, 1
    %v1559 = vsel %vm210, %v1557, %v1558
    %v1560 = vrot.slane %v1320, 1
    %v1561 = vrot.slane %v1336, 1
    %v1562 = vsel %vm210, %v1560, %v1561
    %v1579 = vrot.slane %v1312, 2
    %v1580 = vrot.slane %v1328, 2
    %v1581 = vsel %vm300, %v1579, %v1580
    %v1582 = vrot.slane %v1320, 2
    %v1583 = vrot.slane %v1336, 2
    %v1584 = vsel %vm300, %v1582, %v1583
    %1585 = vrot.lane.b32.xlu0 %v1451, 64
    %v1586 = vpop.permute.xlu0 %1585
    %1587 = vrot.lane.b32.xlu0 %v1454, 64
    %v1588 = vpop.permute.xlu0 %1587
    %1589 = vrot.lane.b32.xlu0 %v1457, 64
    %v1590 = vpop.permute.xlu0 %1589
    %1591 = vrot.lane.b32.xlu0 %v1460, 64
    %v1592 = vpop.permute.xlu0 %1591
    %1593 = vrot.lane.b32.xlu0 %v1463, 64
    %v1594 = vpop.permute.xlu0 %1593
    %1595 = vrot.lane.b32.xlu0 %v1466, 64
    %v1596 = vpop.permute.xlu0 %1595
    %1597 = vrot.lane.b32.xlu0 %v1469, 64
    %v1598 = vpop.permute.xlu0 %1597
    %1599 = vrot.lane.b32.xlu0 %v1581, 64
    %v1600 = vpop.permute.xlu0 %1599
    %1601 = vrot.lane.b32.xlu0 %v1472, 64
    %v1602 = vpop.permute.xlu0 %1601
    %1603 = vrot.lane.b32.xlu0 %v1475, 64
    %v1604 = vpop.permute.xlu0 %1603
    %1605 = vrot.lane.b32.xlu0 %v1478, 64
    %v1606 = vpop.permute.xlu0 %1605
    %1607 = vrot.lane.b32.xlu0 %v1481, 64
    %v1608 = vpop.permute.xlu0 %1607
    %1609 = vrot.lane.b32.xlu0 %v1484, 64
    %v1610 = vpop.permute.xlu0 %1609
    %1611 = vrot.lane.b32.xlu0 %v1487, 64
    %v1612 = vpop.permute.xlu0 %1611
    %1613 = vrot.lane.b32.xlu0 %v1490, 64
    %v1614 = vpop.permute.xlu0 %1613
    %1615 = vrot.lane.b32.xlu0 %v1584, 64
    %v1616 = vpop.permute.xlu0 %1615
    %1633 = vrot.lane.b32.xlu0 %v1559, 64
    %v1634 = vpop.permute.xlu0 %1633
    %1635 = vrot.lane.b32.xlu0 %v1562, 64
    %v1636 = vpop.permute.xlu0 %1635
    %v1639 = vsel %vm494, %v1305, %v1408
    %v1640 = vsel %vm494, %v1306, %v1410
    %v1641 = vsel %vm494, %v1307, %v1412
    %v1642 = vsel %vm494, %v1308, %v1414
    %v1643 = vsel %vm494, %v1309, %v1416
    %v1644 = vsel %vm494, %v1310, %v1418
    %v1645 = vsel %vm494, %v1311, %v1420
    %v1646 = vsel %vm494, %v1313, %v1422
    %v1647 = vsel %vm494, %v1314, %v1424
    %v1648 = vsel %vm494, %v1315, %v1426
    %v1649 = vsel %vm494, %v1316, %v1428
    %v1650 = vsel %vm494, %v1317, %v1430
    %v1651 = vsel %vm494, %v1318, %v1432
    %v1652 = vsel %vm494, %v1319, %v1434
    %v1653 = vsel %vm494, %v302, %v1508
    %v1654 = vsel %vm494, %v1451, %v1510
    %v1655 = vsel %vm494, %v1454, %v1512
    %v1656 = vsel %vm494, %v1457, %v1514
    %v1657 = vsel %vm494, %v1460, %v1516
    %v1658 = vsel %vm494, %v1463, %v1518
    %v1659 = vsel %vm494, %v1466, %v1520
    %v1660 = vsel %vm494, %v1469, %v1522
    %v1661 = vsel %vm494, %v302, %v1524
    %v1662 = vsel %vm494, %v1472, %v1526
    %v1663 = vsel %vm494, %v1475, %v1528
    %v1664 = vsel %vm494, %v1478, %v1530
    %v1665 = vsel %vm494, %v1481, %v1532
    %v1666 = vsel %vm494, %v1484, %v1534
    %v1667 = vsel %vm494, %v1487, %v1536
    %v1668 = vsel %vm494, %v1490, %v1538
    %v1669 = vsel %vm494, %v1367, %v1586
    %v1670 = vsel %vm494, %v1370, %v1588
    %v1671 = vsel %vm494, %v1373, %v1590
    %v1672 = vsel %vm494, %v1376, %v1592
    %v1673 = vsel %vm494, %v1379, %v1594
    %v1674 = vsel %vm494, %v1382, %v1596
    %v1675 = vsel %vm494, %v1385, %v1598
    %v1676 = vsel %vm494, %v1559, %v1600
    %v1677 = vsel %vm494, %v1388, %v1602
    %v1678 = vsel %vm494, %v1391, %v1604
    %v1679 = vsel %vm494, %v1394, %v1606
    %v1680 = vsel %vm494, %v1397, %v1608
    %v1681 = vsel %vm494, %v1400, %v1610
    %v1682 = vsel %vm494, %v1403, %v1612
    %v1683 = vsel %vm494, %v1406, %v1614
    %v1684 = vsel %vm494, %v1562, %v1616
    %v1685 = vsel %vm494, %v1312, %v1634
    %v1686 = vsel %vm494, %v1320, %v1636
    %v1687 = vld [vmem:[#allocation7] sm:$0xff]
    %v1688 = vld [vmem:[#allocation7 + $0x8] sm:$0xff]
    %v1689 = vld [vmem:[#allocation7 + $0x10] sm:$0xff]
    %v1690 = vld [vmem:[#allocation7 + $0x18] sm:$0xff]
    %v1691 = vld [vmem:[#allocation7 + $0x20] sm:$0xff]
    %v1692 = vld [vmem:[#allocation7 + $0x28] sm:$0xff]
    %v1693 = vld [vmem:[#allocation7 + $0x30] sm:$0xff]
    %v1694 = vld [vmem:[#allocation7 + $0x38] sm:$0xff]
    %v1695 = vld [vmem:[#allocation7 + $0x40] sm:$0xff]
    %v1696 = vld [vmem:[#allocation7 + $0x48] sm:$0xff]
    %v1697 = vld [vmem:[#allocation7 + $0x50] sm:$0xff]
    %v1698 = vld [vmem:[#allocation7 + $0x58] sm:$0xff]
    %v1699 = vld [vmem:[#allocation7 + $0x60] sm:$0xff]
    %v1700 = vld [vmem:[#allocation7 + $0x68] sm:$0xff]
    %v1701 = vld [vmem:[#allocation7 + $0x70] sm:$0xff]
    %v1702 = vld [vmem:[#allocation7 + $0x78] sm:$0xff]
    %v1703 = vld [vmem:[#allocation7 + $0x80] sm:$0xff]
    %v1704 = vld [vmem:[#allocation7 + $0x88] sm:$0xff]
    %v1705 = vld [vmem:[#allocation7 + $0x90] sm:$0xff]
    %v1706 = vld [vmem:[#allocation7 + $0x98] sm:$0xff]
    %v1707 = vld [vmem:[#allocation7 + $0xa0] sm:$0xff]
    %v1708 = vld [vmem:[#allocation7 + $0xa8] sm:$0xff]
    %v1709 = vld [vmem:[#allocation7 + $0xb0] sm:$0xff]
    %v1710 = vld [vmem:[#allocation7 + $0xb8] sm:$0xff]
    %v1711 = vld [vmem:[#allocation7 + $0xc0] sm:$0xff]
    %v1712 = vld [vmem:[#allocation7 + $0xc8] sm:$0xff]
    %v1713 = vld [vmem:[#allocation7 + $0xd0] sm:$0xff]
    %v1714 = vld [vmem:[#allocation7 + $0xd8] sm:$0xff]
    %v1715 = vld [vmem:[#allocation7 + $0xe0] sm:$0xff]
    %v1716 = vld [vmem:[#allocation7 + $0xe8] sm:$0xff]
    %v1717 = vld [vmem:[#allocation7 + $0xf0] sm:$0xff]
    %v1718 = vld [vmem:[#allocation7 + $0xf8] sm:$0xff]
    %v1719 = vld [vmem:[#allocation7 + $0x100] sm:$0xff]
    %v1720 = vld [vmem:[#allocation7 + $0x108] sm:$0xff]
    %v1721 = vld [vmem:[#allocation7 + $0x110] sm:$0xff]
    %v1722 = vld [vmem:[#allocation7 + $0x118] sm:$0xff]
    %v1723 = vld [vmem:[#allocation7 + $0x120] sm:$0xff]
    %v1724 = vld [vmem:[#allocation7 + $0x128] sm:$0xff]
    %v1725 = vld [vmem:[#allocation7 + $0x130] sm:$0xff]
    %v1726 = vld [vmem:[#allocation7 + $0x138] sm:$0xff]
    %v1727 = vld [vmem:[#allocation7 + $0x140] sm:$0xff]
    %v1728 = vld [vmem:[#allocation7 + $0x148] sm:$0xff]
    %v1729 = vld [vmem:[#allocation7 + $0x150] sm:$0xff]
    %v1730 = vld [vmem:[#allocation7 + $0x158] sm:$0xff]
    %v1731 = vld [vmem:[#allocation7 + $0x160] sm:$0xff]
    %v1732 = vld [vmem:[#allocation7 + $0x168] sm:$0xff]
    %v1733 = vld [vmem:[#allocation7 + $0x170] sm:$0xff]
    %v1734 = vld [vmem:[#allocation7 + $0x178] sm:$0xff]
    %v1735 = vld [vmem:[#allocation7 + $0x180] sm:$0xff]
    %v1736 = vld [vmem:[#allocation7 + $0x188] sm:$0xff]
    %v1737 = vld [vmem:[#allocation7 + $0x190] sm:$0xff]
    %v1738 = vld [vmem:[#allocation7 + $0x198] sm:$0xff]
    %v1739 = vld [vmem:[#allocation7 + $0x1a0] sm:$0xff]
    %v1740 = vld [vmem:[#allocation7 + $0x1a8] sm:$0xff]
    %v1741 = vld [vmem:[#allocation7 + $0x1b0] sm:$0xff]
    %v1742 = vld [vmem:[#allocation7 + $0x1b8] sm:$0xff]
    %v1743 = vld [vmem:[#allocation7 + $0x1c0] sm:$0xff]
    %v1744 = vld [vmem:[#allocation7 + $0x1c8] sm:$0xff]
    %v1745 = vld [vmem:[#allocation7 + $0x1d0] sm:$0xff]
    %v1746 = vld [vmem:[#allocation7 + $0x1d8] sm:$0xff]
    %v1747 = vld [vmem:[#allocation7 + $0x1e0] sm:$0xff]
    %v1748 = vld [vmem:[#allocation7 + $0x1e8] sm:$0xff]
    %v1749 = vld [vmem:[#allocation7 + $0x1f0] sm:$0xff]
    %v1750 = vld [vmem:[#allocation7 + $0x1f8] sm:$0xff]
    %v1751 = vld [vmem:[#allocation7 + $0x200] sm:$0xff]
    %v1752 = vld [vmem:[#allocation7 + $0x208] sm:$0xff]
    %v1753 = vld [vmem:[#allocation7 + $0x210] sm:$0xff]
    %v1754 = vld [vmem:[#allocation7 + $0x218] sm:$0xff]
    %v1755 = vld [vmem:[#allocation7 + $0x220] sm:$0xff]
    %v1756 = vld [vmem:[#allocation7 + $0x228] sm:$0xff]
    %v1757 = vld [vmem:[#allocation7 + $0x230] sm:$0xff]
    %v1758 = vld [vmem:[#allocation7 + $0x238] sm:$0xff]
    %v1759 = vsel %vm494, %v1454, 0
    %v1761 = vsel %vm494, %v1457, 0
    %v1763 = vsel %vm494, %v1460, 0
    %v1765 = vsel %vm494, %v1463, 0
    %v1767 = vsel %vm494, %v1466, 0
    %v1769 = vsel %vm494, %v1469, 0
    %v1771 = vsel %vm494, %v1581, 0
    %v1773 = vsel %vm494, %v1475, 0
    %v1775 = vsel %vm494, %v1478, 0
    %v1777 = vsel %vm494, %v1481, 0
    %v1779 = vsel %vm494, %v1484, 0
    %v1781 = vsel %vm494, %v1487, 0
    %v1783 = vsel %vm494, %v1490, 0
    %v1785 = vsel %vm494, %v1584, 0
    %1787 = vmatprep.subr.mxu0 0.0
    %1788 = vmatpush1.msra.mxu0 %v1687
    %1789 = vmatprep.subr.mxu0 0.0
    %1790 = vmatpush1.msra.mxu0 %v1688
    %1791 = vmatprep.subr.mxu0 0.0
    %1792 = vmatpush1.msra.mxu0 %v1689
    %1793 = vmatprep.subr.mxu0 0.0
    %1794 = vmatpush1.msra.mxu0 %v1690
    %1795 = vmatprep.subr.mxu0 0.0
    %1796 = vmatpush1.msra.mxu0 %v1691
    %1797 = vmatprep.subr.mxu0 0.0
    %1798 = vmatpush1.msra.mxu0 %v1692
    %1799 = vmatprep.subr.mxu0 0.0
    %1800 = vmatpush1.msra.mxu0 %v1693
    %1801 = vmatprep.subr.mxu0 0.0
    %1802 = vmatpush1.msra.mxu0 %v1694
    %1803 = vmatprep.subr.mxu0 0.0
    %1804 = vmatpush1.msra.mxu0 %v1695
    %1805 = vmatprep.subr.mxu0 0.0
    %1806 = vmatpush1.msra.mxu0 %v1696
    %1807 = vmatprep.subr.mxu0 0.0
    %1808 = vmatpush1.msra.mxu0 %v1697
    %1809 = vmatprep.subr.mxu0 0.0
    %1810 = vmatpush1.msra.mxu0 %v1698
    %1811 = vmatprep.subr.mxu0 0.0
    %1812 = vmatpush1.msra.mxu0 %v1699
    %1813 = vmatprep.subr.mxu0 0.0
    %1814 = vmatpush1.msra.mxu0 %v1700
    %1815 = vmatprep.subr.mxu0 0.0
    %1816 = vmatpush1.msra.mxu0 %v1701
    %1817 = vmatprep.subr.mxu0 0.0
    %1818 = vmatpush1.msra.mxu0 %v1702
    %1819 = vmatprep.subr.mxu0 0.0
    %1820 = vmatpush1.msra.mxu0 %v1703
    %1821 = vmatprep.subr.mxu0 0.0
    %1822 = vmatpush1.msra.mxu0 %v1704
    %1823 = vmatprep.subr.mxu0 0.0
    %1824 = vmatpush1.msra.mxu0 %v1705
    %1825 = vmatprep.subr.mxu0 0.0
    %1826 = vmatpush1.msra.mxu0 %v1706
    %1827 = vmatprep.subr.mxu0 0.0
    %1828 = vmatpush1.msra.mxu0 %v1707
    %1829 = vmatprep.subr.mxu0 0.0
    %1830 = vmatpush1.msra.mxu0 %v1708
    %1831 = vmatprep.subr.mxu0 0.0
    %1832 = vmatpush1.msra.mxu0 %v1709
    %1833 = vmatprep.subr.mxu0 0.0
    %1834 = vmatpush1.msra.mxu0 %v1710
    %1835 = vmatprep.subr.mxu0 0.0
    %1836 = vmatpush1.msra.mxu0 %v1711
    %1837 = vmatprep.subr.mxu0 0.0
    %1838 = vmatpush1.msra.mxu0 %v1712
    %1839 = vmatprep.subr.mxu0 0.0
    %1840 = vmatpush1.msra.mxu0 %v1713
    %1841 = vmatprep.subr.mxu0 0.0
    %1842 = vmatpush1.msra.mxu0 %v1714
    %1843 = vmatprep.subr.mxu0 0.0
    %1844 = vmatpush1.msra.mxu0 %v1715
    %1845 = vmatprep.subr.mxu0 0.0
    %1846 = vmatpush1.msra.mxu0 %v1716
    %1847 = vmatprep.subr.mxu0 0.0
    %1848 = vmatpush1.msra.mxu0 %v1717
    %1849 = vmatprep.subr.mxu0 0.0
    %1850 = vmatpush1.msra.mxu0 %v1718
    %1851 = vmatprep.mubr.f32.mxu0 %v1653
    %1852 = vmatmul.mubr.f32.gmra.mrb[0].mxu0 %v495
    %v1853 = vpop.f32.mrb[0].mxu0
    %v1854 = vadd.f32 0.0, %v1853
    %v1855 = vpop.f32.mrb[0].mxu0
    %1856 = vmatprep.mubr.f32.mxu0 %v1654
    %1857 = vmatmul.mubr.f32.gmra.mrb[0].mxu0 %v1639
    %v1858 = vpop.f32.mrb[0].mxu0
    %v1859 = vadd.f32 0.0, %v1858
    %v1860 = vpop.f32.mrb[0].mxu0
    %1861 = vmatprep.mubr.f32.mxu0 %v1655
    %1862 = vmatmul.mubr.f32.gmra.mrb[0].mxu0 %v1640
    %v1863 = vpop.f32.mrb[0].mxu0
    %v1864 = vadd.f32 0.0, %v1863
    %v1865 = vpop.f32.mrb[0].mxu0
    %1866 = vmatprep.mubr.f32.mxu0 %v1656
    %1867 = vmatmul.mubr.f32.gmra.mrb[0].mxu0 %v1641
    %v1868 = vpop.f32.mrb[0].mxu0
    %v1869 = vadd.f32 0.0, %v1868
    %v1870 = vpop.f32.mrb[0].mxu0
    %1871 = vmatprep.mubr.f32.mxu0 %v1657
    %1872 = vmatmul.mubr.f32.gmra.mrb[0].mxu0 %v1642
    %v1873 = vpop.f32.mrb[0].mxu0
    %v1874 = vadd.f32 0.0, %v1873
    %v1875 = vpop.f32.mrb[0].mxu0
    %1876 = vmatprep.mubr.f32.mxu0 %v1658
    %1877 = vmatmul.mubr.f32.gmra.mrb[0].mxu0 %v1643
    %v1878 = vpop.f32.mrb[0].mxu0
    %v1879 = vadd.f32 0.0, %v1878
    %v1880 = vpop.f32.mrb[0].mxu0
    %1881 = vmatprep.mubr.f32.mxu0 %v1659
    %1882 = vmatmul.mubr.f32.gmra.mrb[0].mxu0 %v1644
    %v1883 = vpop.f32.mrb[0].mxu0
    %v1884 = vadd.f32 0.0, %v1883
    %v1885 = vpop.f32.mrb[0].mxu0
    %1886 = vmatprep.mubr.f32.mxu0 %v1660
    %1887 = vmatmul.mubr.f32.gmra.mrb[0].mxu0 %v1645
    %v1888 = vpop.f32.mrb[0].mxu0
    %v1889 = vadd.f32 0.0, %v1888
    %v1890 = vpop.f32.mrb[0].mxu0
    %1891 = vmatprep.mubr.f32.mxu0 %v1661
    %1892 = vmatmul.mubr.f32.gmra.mrb[0].mxu0 %v495
    %v1893 = vpop.f32.mrb[0].mxu0
    %v1894 = vadd.f32 0.0, %v1893
    %v1895 = vpop.f32.mrb[0].mxu0
    %1896 = vmatprep.mubr.f32.mxu0 %v1662
    %1897 = vmatmul.mubr.f32.gmra.mrb[0].mxu0 %v1646
    %v1898 = vpop.f32.mrb[0].mxu0
    %v1899 = vadd.f32 0.0, %v1898
    %v1900 = vpop.f32.mrb[0].mxu0
    %1901 = vmatprep.mubr.f32.mxu0 %v1663
    %1902 = vmatmul.mubr.f32.gmra.mrb[0].mxu0 %v1647
    %v1903 = vpop.f32.mrb[0].mxu0
    %v1904 = vadd.f32 0.0, %v1903
    %v1905 = vpop.f32.mrb[0].mxu0
    %1906 = vmatprep.mubr.f32.mxu0 %v1664
    %1907 = vmatmul.mubr.f32.gmra.mrb[0].mxu0 %v1648
    %v1908 = vpop.f32.mrb[0].mxu0
    %v1909 = vadd.f32 0.0, %v1908
    %v1910 = vpop.f32.mrb[0].mxu0
    %1911 = vmatprep.mubr.f32.mxu0 %v1665
    %1912 = vmatmul.mubr.f32.gmra.mrb[0].mxu0 %v1649
    %v1913 = vpop.f32.mrb[0].mxu0
    %v1914 = vadd.f32 0.0, %v1913
    %v1915 = vpop.f32.mrb[0].mxu0
    %1916 = vmatprep.mubr.f32.mxu0 %v1666
    %1917 = vmatmul.mubr.f32.gmra.mrb[0].mxu0 %v1650
    %v1918 = vpop.f32.mrb[0].mxu0
    %v1919 = vadd.f32 0.0, %v1918
    %v1920 = vpop.f32.mrb[0].mxu0
    %1921 = vmatprep.mubr.f32.mxu0 %v1667
    %1922 = vmatmul.mubr.f32.gmra.mrb[0].mxu0 %v1651
    %v1923 = vpop.f32.mrb[0].mxu0
    %v1924 = vadd.f32 0.0, %v1923
    %v1925 = vpop.f32.mrb[0].mxu0
    %1926 = vmatprep.mubr.f32.mxu0 %v1668
    %1927 = vmatmul.mubr.f32.gmra.mrb[0].mxu0 %v1652
    %v1928 = vpop.f32.mrb[0].mxu0
    %v1929 = vadd.f32 0.0, %v1928
    %v1930 = vpop.f32.mrb[0].mxu0
    %1931 = vdwg.mxu0
    %1932 = vmatprep.subr.mxu0 0.0
    %1933 = vmatpush1.msra.mxu0 %v1719
    %1934 = vmatprep.subr.mxu0 0.0
    %1935 = vmatpush1.msra.mxu0 %v1720
    %1936 = vmatprep.subr.mxu0 0.0
    %1937 = vmatpush1.msra.mxu0 %v1721
    %1938 = vmatprep.subr.mxu0 0.0
    %1939 = vmatpush1.msra.mxu0 %v1722
    %1940 = vmatprep.subr.mxu0 0.0
    %1941 = vmatpush1.msra.mxu0 %v1723
    %1942 = vmatprep.subr.mxu0 0.0
    %1943 = vmatpush1.msra.mxu0 %v1724
    %1944 = vmatprep.subr.mxu0 0.0
    %1945 = vmatpush1.msra.mxu0 %v1725
    %1946 = vmatprep.subr.mxu0 0.0
    %1947 = vmatpush1.msra.mxu0 %v1726
    %1948 = vmatprep.subr.mxu0 0.0
    %1949 = vmatpush1.msra.mxu0 %v1727
    %1950 = vmatprep.subr.mxu0 0.0
    %1951 = vmatpush1.msra.mxu0 %v1728
    %1952 = vmatprep.subr.mxu0 0.0
    %1953 = vmatpush1.msra.mxu0 %v1729
    %1954 = vmatprep.subr.mxu0 0.0
    %1955 = vmatpush1.msra.mxu0 %v1730
    %1956 = vmatprep.subr.mxu0 0.0
    %1957 = vmatpush1.msra.mxu0 %v1731
    %1958 = vmatprep.subr.mxu0 0.0
    %1959 = vmatpush1.msra.mxu0 %v1732
    %1960 = vmatprep.subr.mxu0 0.0
    %1961 = vmatpush1.msra.mxu0 %v1733
    %1962 = vmatprep.subr.mxu0 0.0
    %1963 = vmatpush1.msra.mxu0 %v1734
    %1964 = vmatprep.subr.mxu0 0.0
    %1965 = vmatpush1.msra.mxu0 %v1735
    %1966 = vmatprep.subr.mxu0 0.0
    %1967 = vmatpush1.msra.mxu0 %v1736
    %1968 = vmatprep.subr.mxu0 0.0
    %1969 = vmatpush1.msra.mxu0 %v1737
    %1970 = vmatprep.subr.mxu0 0.0
    %1971 = vmatpush1.msra.mxu0 %v1738
    %1972 = vmatprep.subr.mxu0 0.0
    %1973 = vmatpush1.msra.mxu0 %v1739
    %1974 = vmatprep.subr.mxu0 0.0
    %1975 = vmatpush1.msra.mxu0 %v1740
    %1976 = vmatprep.subr.mxu0 0.0
    %1977 = vmatpush1.msra.mxu0 %v1741
    %1978 = vmatprep.subr.mxu0 0.0
    %1979 = vmatpush1.msra.mxu0 %v1742
    %1980 = vmatprep.subr.mxu0 0.0
    %1981 = vmatpush1.msra.mxu0 %v1743
    %1982 = vmatprep.subr.mxu0 0.0
    %1983 = vmatpush1.msra.mxu0 %v1744
    %1984 = vmatprep.subr.mxu0 0.0
    %1985 = vmatpush1.msra.mxu0 %v1745
    %1986 = vmatprep.subr.mxu0 0.0
    %1987 = vmatpush1.msra.mxu0 %v1746
    %1988 = vmatprep.subr.mxu0 0.0
    %1989 = vmatpush1.msra.mxu0 %v1747
    %1990 = vmatprep.subr.mxu0 0.0
    %1991 = vmatpush1.msra.mxu0 %v1748
    %1992 = vmatprep.subr.mxu0 0.0
    %1993 = vmatpush1.msra.mxu0 %v1749
    %1994 = vmatprep.subr.mxu0 0.0
    %1995 = vmatpush1.msra.mxu0 %v1750
    %1996 = vmatprep.mubr.f32.mxu0 %v1640
    %1997 = vmatmul.mubr.f32.gmra.mrb[0].mxu0 %v1669
    %v1998 = vpop.f32.mrb[0].mxu0
    %v1999 = vadd.f32 %v1854, %v1998
    %v2000 = vpop.f32.mrb[0].mxu0
    %2001 = vmatprep.mubr.f32.mxu0 %v1641
    %2002 = vmatmul.mubr.f32.gmra.mrb[0].mxu0 %v1670
    %v2003 = vpop.f32.mrb[0].mxu0
    %v2004 = vadd.f32 %v1859, %v2003
    %v2005 = vpop.f32.mrb[0].mxu0
    %2006 = vmatprep.mubr.f32.mxu0 %v1642
    %2007 = vmatmul.mubr.f32.gmra.mrb[0].mxu0 %v1671
    %v2008 = vpop.f32.mrb[0].mxu0
    %v2009 = vadd.f32 %v1864, %v2008
    %v2010 = vpop.f32.mrb[0].mxu0
    %2011 = vmatprep.mubr.f32.mxu0 %v1643
    %2012 = vmatmul.mubr.f32.gmra.mrb[0].mxu0 %v1672
    %v2013 = vpop.f32.mrb[0].mxu0
    %v2014 = vadd.f32 %v1869, %v2013
    %v2015 = vpop.f32.mrb[0].mxu0
    %2016 = vmatprep.mubr.f32.mxu0 %v1644
    %2017 = vmatmul.mubr.f32.gmra.mrb[0].mxu0 %v1673
    %v2018 = vpop.f32.mrb[0].mxu0
    %v2019 = vadd.f32 %v1874, %v2018
    %v2020 = vpop.f32.mrb[0].mxu0
    %2021 = vmatprep.mubr.f32.mxu0 %v1645
    %2022 = vmatmul.mubr.f32.gmra.mrb[0].mxu0 %v1674
    %v2023 = vpop.f32.mrb[0].mxu0
    %v2024 = vadd.f32 %v1879, %v2023
    %v2025 = vpop.f32.mrb[0].mxu0
    %2026 = vmatprep.mubr.f32.mxu0 %v1685
    %2027 = vmatmul.mubr.f32.gmra.mrb[0].mxu0 %v1675
    %v2028 = vpop.f32.mrb[0].mxu0
    %v2029 = vadd.f32 %v1884, %v2028
    %v2030 = vpop.f32.mrb[0].mxu0
    %2031 = vmatprep.mubr.f32.mxu0 %v495
    %2032 = vmatmul.mubr.f32.gmra.mrb[0].mxu0 %v1676
    %v2033 = vpop.f32.mrb[0].mxu0
    %v2034 = vadd.f32 %v1889, %v2033
    %v2035 = vpop.f32.mrb[0].mxu0
    %2036 = vmatprep.mubr.f32.mxu0 %v1647
    %2037 = vmatmul.mubr.f32.gmra.mrb[0].mxu0 %v1677
    %v2038 = vpop.f32.mrb[0].mxu0
    %v2039 = vadd.f32 %v1894, %v2038
    %v2040 = vpop.f32.mrb[0].mxu0
    %2041 = vmatprep.mubr.f32.mxu0 %v1648
    %2042 = vmatmul.mubr.f32.gmra.mrb[0].mxu0 %v1678
    %v2043 = vpop.f32.mrb[0].mxu0
    %v2044 = vadd.f32 %v1899, %v2043
    %v2045 = vpop.f32.mrb[0].mxu0
    %2046 = vmatprep.mubr.f32.mxu0 %v1649
    %2047 = vmatmul.mubr.f32.gmra.mrb[0].mxu0 %v1679
    %v2048 = vpop.f32.mrb[0].mxu0
    %v2049 = vadd.f32 %v1904, %v2048
    %v2050 = vpop.f32.mrb[0].mxu0
    %2051 = vmatprep.mubr.f32.mxu0 %v1650
    %2052 = vmatmul.mubr.f32.gmra.mrb[0].mxu0 %v1680
    %v2053 = vpop.f32.mrb[0].mxu0
    %v2054 = vadd.f32 %v1909, %v2053
    %v2055 = vpop.f32.mrb[0].mxu0
    %2056 = vmatprep.mubr.f32.mxu0 %v1651
    %2057 = vmatmul.mubr.f32.gmra.mrb[0].mxu0 %v1681
    %v2058 = vpop.f32.mrb[0].mxu0
    %v2059 = vadd.f32 %v1914, %v2058
    %v2060 = vpop.f32.mrb[0].mxu0
    %2061 = vmatprep.mubr.f32.mxu0 %v1652
    %2062 = vmatmul.mubr.f32.gmra.mrb[0].mxu0 %v1682
    %v2063 = vpop.f32.mrb[0].mxu0
    %v2064 = vadd.f32 %v1919, %v2063
    %v2065 = vpop.f32.mrb[0].mxu0
    %2066 = vmatprep.mubr.f32.mxu0 %v1686
    %2067 = vmatmul.mubr.f32.gmra.mrb[0].mxu0 %v1683
    %v2068 = vpop.f32.mrb[0].mxu0
    %v2069 = vadd.f32 %v1924, %v2068
    %v2070 = vpop.f32.mrb[0].mxu0
    %2071 = vmatprep.mubr.f32.mxu0 %v495
    %2072 = vmatmul.mubr.f32.gmra.mrb[0].mxu0 %v1684
    %v2073 = vpop.f32.mrb[0].mxu0
    %v2074 = vadd.f32 %v1929, %v2073
    %v2075 = vpop.f32.mrb[0].mxu0
    %2076 = vdwg.mxu0
    %2077 = vmatprep.subr.mxu0 0.0
    %2078 = vmatpush1.msra.mxu0 %v1751
    %2079 = vmatprep.subr.mxu0 0.0
    %2080 = vmatpush1.msra.mxu0 %v1752
    %2081 = vmatprep.subr.mxu0 0.0
    %2082 = vmatpush1.msra.mxu0 %v1753
    %2083 = vmatprep.subr.mxu0 0.0
    %2084 = vmatpush1.msra.mxu0 %v1754
    %2085 = vmatprep.subr.mxu0 0.0
    %2086 = vmatpush1.msra.mxu0 %v1755
    %2087 = vmatprep.subr.mxu0 0.0
    %2088 = vmatpush1.msra.mxu0 %v1756
    %2089 = vmatprep.subr.mxu0 0.0
    %2090 = vmatpush1.msra.mxu0 %v1757
    %2091 = vmatprep.subr.mxu0 0.0
    %2092 = vmatpush1.msra.mxu0 %v1758
    %2093 = vmatprep.subr.mxu0 0.0
    %2094 = vmatpush1.msra.mxu0 0.0
    %2095 = vmatprep.subr.mxu0 0.0
    %2096 = vmatpush1.msra.mxu0 0.0
    %2097 = vmatprep.subr.mxu0 0.0
    %2098 = vmatpush1.msra.mxu0 0.0
    %2099 = vmatprep.subr.mxu0 0.0
    %2100 = vmatpush1.msra.mxu0 0.0
    %2101 = vmatprep.subr.mxu0 0.0
    %2102 = vmatpush1.msra.mxu0 0.0
    %2103 = vmatprep.subr.mxu0 0.0
    %2104 = vmatpush1.msra.mxu0 0.0
    %2105 = vmatprep.subr.mxu0 0.0
    %2106 = vmatpush1.msra.mxu0 0.0
    %2107 = vmatprep.subr.mxu0 0.0
    %2108 = vmatpush1.msra.mxu0 0.0
    %2109 = vmatprep.subr.mxu0 0.0
    %2110 = vmatpush1.msra.mxu0 0.0
    %2111 = vmatprep.subr.mxu0 0.0
    %2112 = vmatpush1.msra.mxu0 0.0
    %2113 = vmatprep.subr.mxu0 0.0
    %2114 = vmatpush1.msra.mxu0 0.0
    %2115 = vmatprep.subr.mxu0 0.0
    %2116 = vmatpush1.msra.mxu0 0.0
    %2117 = vmatprep.subr.mxu0 0.0
    %2118 = vmatpush1.msra.mxu0 0.0
    %2119 = vmatprep.subr.mxu0 0.0
    %2120 = vmatpush1.msra.mxu0 0.0
    %2121 = vmatprep.subr.mxu0 0.0
    %2122 = vmatpush1.msra.mxu0 0.0
    %2123 = vmatprep.subr.mxu0 0.0
    %2124 = vmatpush1.msra.mxu0 0.0
    %2125 = vmatprep.subr.mxu0 0.0
    %2126 = vmatpush1.msra.mxu0 0.0
    %2127 = vmatprep.subr.mxu0 0.0
    %2128 = vmatpush1.msra.mxu0 0.0
    %2129 = vmatprep.subr.mxu0 0.0
    %2130 = vmatpush1.msra.mxu0 0.0
    %2131 = vmatprep.subr.mxu0 0.0
    %2132 = vmatpush1.msra.mxu0 0.0
    %2133 = vmatprep.subr.mxu0 0.0
    %2134 = vmatpush1.msra.mxu0 0.0
    %2135 = vmatprep.subr.mxu0 0.0
    %2136 = vmatpush1.msra.mxu0 0.0
    %2137 = vmatprep.subr.mxu0 0.0
    %2138 = vmatpush1.msra.mxu0 0.0
    %2139 = vmatprep.subr.mxu0 0.0
    %2140 = vmatpush1.msra.mxu0 0.0
    %2141 = vmatprep.mubr.f32.mxu0 0.0
    %2142 = vmatmul.mubr.f32.gmra.mrb[0].mxu0 %v1759
    %v2143 = vpop.f32.mrb[0].mxu0
    %v2144 = vadd.f32 %v1999, %v2143
    %v2145 = vpop.f32.mrb[0].mxu0
    %2146 = vmatprep.mubr.f32.mxu0 0.0
    %2147 = vmatmul.mubr.f32.gmra.mrb[0].mxu0 %v1761
    %v2148 = vpop.f32.mrb[0].mxu0
    %v2149 = vadd.f32 %v2004, %v2148
    %v2150 = vpop.f32.mrb[0].mxu0
    %2151 = vmatprep.mubr.f32.mxu0 0.0
    %2152 = vmatmul.mubr.f32.gmra.mrb[0].mxu0 %v1763
    %v2153 = vpop.f32.mrb[0].mxu0
    %v2154 = vadd.f32 %v2009, %v2153
    %v2155 = vpop.f32.mrb[0].mxu0
    %2156 = vmatprep.mubr.f32.mxu0 0.0
    %2157 = vmatmul.mubr.f32.gmra.mrb[0].mxu0 %v1765
    %v2158 = vpop.f32.mrb[0].mxu0
    %v2159 = vadd.f32 %v2014, %v2158
    %v2160 = vpop.f32.mrb[0].mxu0
    %2161 = vmatprep.mubr.f32.mxu0 0.0
    %2162 = vmatmul.mubr.f32.gmra.mrb[0].mxu0 %v1767
    %v2163 = vpop.f32.mrb[0].mxu0
    %v2164 = vadd.f32 %v2019, %v2163
    %v2165 = vpop.f32.mrb[0].mxu0
    %2166 = vmatprep.mubr.f32.mxu0 0.0
    %2167 = vmatmul.mubr.f32.gmra.mrb[0].mxu0 %v1769
    %v2168 = vpop.f32.mrb[0].mxu0
    %v2169 = vadd.f32 %v2024, %v2168
    %v2170 = vpop.f32.mrb[0].mxu0
    %2171 = vmatprep.mubr.f32.mxu0 0.0
    %2172 = vmatmul.mubr.f32.gmra.mrb[0].mxu0 %v1771
    %v2173 = vpop.f32.mrb[0].mxu0
    %v2174 = vadd.f32 %v2029, %v2173
    %v2175 = vpop.f32.mrb[0].mxu0
    %2176 = vmatprep.mubr.f32.mxu0 0.0
    %2177 = vmatmul.mubr.f32.gmra.mrb[0].mxu0 %v630
    %v2178 = vpop.f32.mrb[0].mxu0
    %v2179 = vadd.f32 %v2034, %v2178
    %v2180 = vpop.f32.mrb[0].mxu0
    %2181 = vmatprep.mubr.f32.mxu0 0.0
    %2182 = vmatmul.mubr.f32.gmra.mrb[0].mxu0 %v1773
    %v2183 = vpop.f32.mrb[0].mxu0
    %v2184 = vadd.f32 %v2039, %v2183
    %v2185 = vpop.f32.mrb[0].mxu0
    %2186 = vmatprep.mubr.f32.mxu0 0.0
    %2187 = vmatmul.mubr.f32.gmra.mrb[0].mxu0 %v1775
    %v2188 = vpop.f32.mrb[0].mxu0
    %v2189 = vadd.f32 %v2044, %v2188
    %v2190 = vpop.f32.mrb[0].mxu0
    %2191 = vmatprep.mubr.f32.mxu0 0.0
    %2192 = vmatmul.mubr.f32.gmra.mrb[0].mxu0 %v1777
    %v2193 = vpop.f32.mrb[0].mxu0
    %v2194 = vadd.f32 %v2049, %v2193
    %v2195 = vpop.f32.mrb[0].mxu0
    %2196 = vmatprep.mubr.f32.mxu0 0.0
    %2197 = vmatmul.mubr.f32.gmra.mrb[0].mxu0 %v1779
    %v2198 = vpop.f32.mrb[0].mxu0
    %v2199 = vadd.f32 %v2054, %v2198
    %v2200 = vpop.f32.mrb[0].mxu0
    %2201 = vmatprep.mubr.f32.mxu0 0.0
    %2202 = vmatmul.mubr.f32.gmra.mrb[0].mxu0 %v1781
    %v2203 = vpop.f32.mrb[0].mxu0
    %v2204 = vadd.f32 %v2059, %v2203
    %v2205 = vpop.f32.mrb[0].mxu0
    %2206 = vmatprep.mubr.f32.mxu0 0.0
    %2207 = vmatmul.mubr.f32.gmra.mrb[0].mxu0 %v1783
    %v2208 = vpop.f32.mrb[0].mxu0
    %v2209 = vadd.f32 %v2064, %v2208
    %v2210 = vpop.f32.mrb[0].mxu0
    %2211 = vmatprep.mubr.f32.mxu0 0.0
    %2212 = vmatmul.mubr.f32.gmra.mrb[0].mxu0 %v1785
    %v2213 = vpop.f32.mrb[0].mxu0
    %v2214 = vadd.f32 %v2069, %v2213
    %v2215 = vpop.f32.mrb[0].mxu0
    %2216 = vmatprep.mubr.f32.mxu0 0.0
    %2217 = vmatmul.mubr.f32.gmra.mrb[0].mxu0 %v630
    %v2218 = vpop.f32.mrb[0].mxu0
    %v2219 = vadd.f32 %v2074, %v2218
    %v2220 = vpop.f32.mrb[0].mxu0
    %2221 = vdwg.mxu0
    %v2222 = vld [vmem:[%s5] sm:$0x1]
    %v2223 = vld [vmem:[%s6] sm:$0x1]
    %v2224 = vsel %vm494, %v2144, 0.0
    %v2225 = vsel %vm494, %v2149, 0.0
    %v2226 = vadd.f32 %v2224, %v2225
    %v2227 = vsel %vm494, %v2154, 0.0
    %v2228 = vadd.f32 %v2226, %v2227
    %v2229 = vsel %vm494, %v2159, 0.0
    %v2230 = vadd.f32 %v2228, %v2229
    %v2231 = vsel %vm494, %v2164, 0.0
    %v2232 = vadd.f32 %v2230, %v2231
    %v2233 = vsel %vm494, %v2169, 0.0
    %v2234 = vadd.f32 %v2232, %v2233
    %v2235 = vsel %vm494, %v2174, 0.0
    %v2236 = vadd.f32 %v2234, %v2235
    %v2237 = vsel %vm494, %v2179, 0.0
    %v2238 = vadd.f32 %v2236, %v2237
    %v2239 = vsel %vm494, %v2184, 0.0
    %v2240 = vadd.f32 %v2238, %v2239
    %v2241 = vsel %vm494, %v2189, 0.0
    %v2242 = vadd.f32 %v2240, %v2241
    %v2243 = vsel %vm494, %v2194, 0.0
    %v2244 = vadd.f32 %v2242, %v2243
    %v2245 = vsel %vm494, %v2199, 0.0
    %v2246 = vadd.f32 %v2244, %v2245
    %v2247 = vsel %vm494, %v2204, 0.0
    %v2248 = vadd.f32 %v2246, %v2247
    %v2249 = vsel %vm494, %v2209, 0.0
    %v2250 = vadd.f32 %v2248, %v2249
    %v2251 = vsel %vm494, %v2214, 0.0
    %v2252 = vadd.f32 %v2250, %v2251
    %v2253 = vsel %vm494, %v2219, 0.0
    %v2254 = vadd.f32 %v2252, %v2253
    %v2255 = vrot.slane %v2254, 4
    %v2256 = vadd.f32 %v2254, %v2255
    %v2257 = vrot.slane %v2256, 2
    %v2258 = vadd.f32 %v2256, %v2257
    %v2259 = vrot.slane %v2258, 1
    %v2260 = vadd.f32 %v2258, %v2259
    %v2261 = vmul.f32 %v2260, %v1120
    %v2262 = vsub.f32 %v2144, %v2261
    %v2263 = vsub.f32 %v2149, %v2261
    %v2264 = vsub.f32 %v2154, %v2261
    %v2265 = vsub.f32 %v2159, %v2261
    %v2266 = vsub.f32 %v2164, %v2261
    %v2267 = vsub.f32 %v2169, %v2261
    %v2268 = vsub.f32 %v2174, %v2261
    %v2269 = vsub.f32 %v2179, %v2261
    %v2270 = vsub.f32 %v2184, %v2261
    %v2271 = vsub.f32 %v2189, %v2261
    %v2272 = vsub.f32 %v2194, %v2261
    %v2273 = vsub.f32 %v2199, %v2261
    %v2274 = vsub.f32 %v2204, %v2261
    %v2275 = vsub.f32 %v2209, %v2261
    %v2276 = vsub.f32 %v2214, %v2261
    %v2277 = vsub.f32 %v2219, %v2261
    %v2278 = vmul.f32 %v2262, %v2262
    %v2279 = vmul.f32 %v2263, %v2263
    %v2280 = vmul.f32 %v2264, %v2264
    %v2281 = vmul.f32 %v2265, %v2265
    %v2282 = vmul.f32 %v2266, %v2266
    %v2283 = vmul.f32 %v2267, %v2267
    %v2284 = vmul.f32 %v2268, %v2268
    %v2285 = vmul.f32 %v2269, %v2269
    %v2286 = vmul.f32 %v2270, %v2270
    %v2287 = vmul.f32 %v2271, %v2271
    %v2288 = vmul.f32 %v2272, %v2272
    %v2289 = vmul.f32 %v2273, %v2273
    %v2290 = vmul.f32 %v2274, %v2274
    %v2291 = vmul.f32 %v2275, %v2275
    %v2292 = vmul.f32 %v2276, %v2276
    %v2293 = vmul.f32 %v2277, %v2277
    %v2294 = vsel %vm494, %v2278, 0.0
    %v2295 = vsel %vm494, %v2279, 0.0
    %v2296 = vadd.f32 %v2294, %v2295
    %v2297 = vsel %vm494, %v2280, 0.0
    %v2298 = vadd.f32 %v2296, %v2297
    %v2299 = vsel %vm494, %v2281, 0.0
    %v2300 = vadd.f32 %v2298, %v2299
    %v2301 = vsel %vm494, %v2282, 0.0
    %v2302 = vadd.f32 %v2300, %v2301
    %v2303 = vsel %vm494, %v2283, 0.0
    %v2304 = vadd.f32 %v2302, %v2303
    %v2305 = vsel %vm494, %v2284, 0.0
    %v2306 = vadd.f32 %v2304, %v2305
    %v2307 = vsel %vm494, %v2285, 0.0
    %v2308 = vadd.f32 %v2306, %v2307
    %v2309 = vsel %vm494, %v2286, 0.0
    %v2310 = vadd.f32 %v2308, %v2309
    %v2311 = vsel %vm494, %v2287, 0.0
    %v2312 = vadd.f32 %v2310, %v2311
    %v2313 = vsel %vm494, %v2288, 0.0
    %v2314 = vadd.f32 %v2312, %v2313
    %v2315 = vsel %vm494, %v2289, 0.0
    %v2316 = vadd.f32 %v2314, %v2315
    %v2317 = vsel %vm494, %v2290, 0.0
    %v2318 = vadd.f32 %v2316, %v2317
    %v2319 = vsel %vm494, %v2291, 0.0
    %v2320 = vadd.f32 %v2318, %v2319
    %v2321 = vsel %vm494, %v2292, 0.0
    %v2322 = vadd.f32 %v2320, %v2321
    %v2323 = vsel %vm494, %v2293, 0.0
    %v2324 = vadd.f32 %v2322, %v2323
    %v2325 = vrot.slane %v2324, 4
    %v2326 = vadd.f32 %v2324, %v2325
    %v2327 = vrot.slane %v2326, 2
    %v2328 = vadd.f32 %v2326, %v2327
    %v2329 = vrot.slane %v2328, 1
    %v2330 = vadd.f32 %v2328, %v2329
    %v2331 = vmul.f32 %v2330, %v1120
    %v2332 = vadd.f32 %v2331, 1e-05
    %v2333 = vrsqrt.pop %v2332
    %v2334 = vmul.f32 %v2222, %v2333
    %v2335 = vmul.f32 %v2261, %v2334
    %v2336 = vsub.f32 %v2223, %v2335
    %v2338 = vlaneseq
    %v2339 = vshrl.u32 %v2338, 7
    %v2340 = vsub.s32 0, %v2339
    %v2341 = vrot.slane %v2334, %v2340
    %v2343 = vmul.f32 %v2144, %v2341
    %v2344 = vmul.f32 %v2149, %v2341
    %v2345 = vmul.f32 %v2154, %v2341
    %v2346 = vmul.f32 %v2159, %v2341
    %v2347 = vmul.f32 %v2164, %v2341
    %v2348 = vmul.f32 %v2169, %v2341
    %v2349 = vmul.f32 %v2174, %v2341
    %v2350 = vmul.f32 %v2179, %v2341
    %v2351 = vmul.f32 %v2184, %v2341
    %v2352 = vmul.f32 %v2189, %v2341
    %v2353 = vmul.f32 %v2194, %v2341
    %v2354 = vmul.f32 %v2199, %v2341
    %v2355 = vmul.f32 %v2204, %v2341
    %v2356 = vmul.f32 %v2209, %v2341
    %v2357 = vmul.f32 %v2214, %v2341
    %v2358 = vmul.f32 %v2219, %v2341
    %v2360 = vlaneseq
    %v2361 = vshrl.u32 %v2360, 7
    %v2362 = vsub.s32 0, %v2361
    %v2363 = vrot.slane %v2336, %v2362
    %v2365 = vadd.f32 %v2343, %v2363
    %v2366 = vadd.f32 %v2344, %v2363
    %v2367 = vadd.f32 %v2345, %v2363
    %v2368 = vadd.f32 %v2346, %v2363
    %v2369 = vadd.f32 %v2347, %v2363
    %v2370 = vadd.f32 %v2348, %v2363
    %v2371 = vadd.f32 %v2349, %v2363
    %v2372 = vadd.f32 %v2350, %v2363
    %v2373 = vadd.f32 %v2351, %v2363
    %v2374 = vadd.f32 %v2352, %v2363
    %v2375 = vadd.f32 %v2353, %v2363
    %v2376 = vadd.f32 %v2354, %v2363
    %v2377 = vadd.f32 %v2355, %v2363
    %v2378 = vadd.f32 %v2356, %v2363
    %v2379 = vadd.f32 %v2357, %v2363
    %v2380 = vadd.f32 %v2358, %v2363
    %v2381 = vadd.f32 %v2365, %v68
    %v2382 = vadd.f32 %v2366, %v69
    %v2383 = vadd.f32 %v2367, %v70
    %v2384 = vadd.f32 %v2368, %v71
    %v2385 = vadd.f32 %v2369, %v72
    %v2386 = vadd.f32 %v2370, %v73
    %v2387 = vadd.f32 %v2371, %v74
    %v2388 = vadd.f32 %v2372, %v75
    %v2389 = vadd.f32 %v2373, %v76
    %v2390 = vadd.f32 %v2374, %v77
    %v2391 = vadd.f32 %v2375, %v78
    %v2392 = vadd.f32 %v2376, %v79
    %v2393 = vadd.f32 %v2377, %v80
    %v2394 = vadd.f32 %v2378, %v81
    %v2395 = vadd.f32 %v2379, %v82
    %v2396 = vadd.f32 %v2380, %v83
    %v2397 = vmax.f32 %v2381, 0.0
    %v2398 = vmax.f32 %v2382, 0.0
    %v2399 = vmax.f32 %v2383, 0.0
    %v2400 = vmax.f32 %v2384, 0.0
    %v2401 = vmax.f32 %v2385, 0.0
    %v2402 = vmax.f32 %v2386, 0.0
    %v2403 = vmax.f32 %v2387, 0.0
    %v2404 = vmax.f32 %v2388, 0.0
    %v2405 = vmax.f32 %v2389, 0.0
    %v2406 = vmax.f32 %v2390, 0.0
    %v2407 = vmax.f32 %v2391, 0.0
    %v2408 = vmax.f32 %v2392, 0.0
    %v2409 = vmax.f32 %v2393, 0.0
    %v2410 = vmax.f32 %v2394, 0.0
    %v2411 = vmax.f32 %v2395, 0.0
    %v2412 = vmax.f32 %v2396, 0.0
    %2413 = vst.msk [vmem:[#allocation8] sm:$0xff] %vm494, %v2397
    %2414 = vst.msk [vmem:[#allocation8 + $0x8] sm:$0xff] %vm494, %v2398
    %2415 = vst.msk [vmem:[#allocation8 + $0x10] sm:$0xff] %vm494, %v2399
    %2416 = vst.msk [vmem:[#allocation8 + $0x18] sm:$0xff] %vm494, %v2400
    %2417 = vst.msk [vmem:[#allocation8 + $0x20] sm:$0xff] %vm494, %v2401
    %2418 = vst.msk [vmem:[#allocation8 + $0x28] sm:$0xff] %vm494, %v2402
    %2419 = vst.msk [vmem:[#allocation8 + $0x30] sm:$0xff] %vm494, %v2403
    %2420 = vst.msk [vmem:[#allocation8 + $0x38] sm:$0xff] %vm494, %v2404
    %2421 = vst.msk [vmem:[#allocation8 + $0x40] sm:$0xff] %vm494, %v2405
    %2422 = vst.msk [vmem:[#allocation8 + $0x48] sm:$0xff] %vm494, %v2406
    %2423 = vst.msk [vmem:[#allocation8 + $0x50] sm:$0xff] %vm494, %v2407
    %2424 = vst.msk [vmem:[#allocation8 + $0x58] sm:$0xff] %vm494, %v2408
    %2425 = vst.msk [vmem:[#allocation8 + $0x60] sm:$0xff] %vm494, %v2409
    %2426 = vst.msk [vmem:[#allocation8 + $0x68] sm:$0xff] %vm494, %v2410
    %2427 = vst.msk [vmem:[#allocation8 + $0x70] sm:$0xff] %vm494, %v2411
    %2428 = vst.msk [vmem:[#allocation8 + $0x78] sm:$0xff] %vm494, %v2412
    // Predicated region
    $region42: #{resnet18_layer3_forward.1} parent=1 // pred_check
      _
    $region43: #{resnet18_layer3_forward.1} parent=1 // pred_check_branch
      %2430 = sbr.rel (0) target = $region45
    $region44: #{resnet18_layer3_forward.1} parent=1 // pred_region
      %s2432 = ssub.s32 2048, 2048
      %2433 = vsyncadd [#allocation4], %s2432
      %s2434 = sshll.u32 [#allocation8], 4
      %s2435 = int_to_ptr.vmem [resolvable:$true] %s2434
      %2440 = dma.vmem_to_hbm [thread:$0]  %s2435, 2048, %s7, [#allocation4], 128, 128, 8
    $region45: #{resnet18_layer3_forward.1} parent=1 // pred_fallthru
      _
    // Predicated region
    $region46: #{resnet18_layer3_forward.1} parent=1 // pred_check
      _
    $region47: #{resnet18_layer3_forward.1} parent=1 // pred_check_branch
      %2442 = sbr.rel (0) target = $region49
    $region48: #{resnet18_layer3_forward.1} parent=1 // pred_region
      %2443 = dma.done [#allocation4], 2048
    $region49: #{resnet18_layer3_forward.1} parent=1 // pred_fallthru
      _
    %2444 = vsyncpa [#allocation3], 1
    %2445 = vsyncpa [#allocation6], 1
    %2446 = vsyncpa [#allocation4], 1

</llo_original>
